<compile_context>
chip_gen: v7x
topology: tpu7x:2x2x1
jax: 0.10.0
libtpu: 0.0.40
codegen_flags: <defaults>
</compile_context>

<pallas_src>
import numpy as np
import jax
import jax.numpy as jnp
from jax.experimental import pallas as pl
from jax.experimental.pallas import tpu as pltpu


# ----------------------------------------------------------------------------
# Pallas kernel: fused Conv2d(k, stride=1) [+ GroupNorm(2) + SiLU]
# ----------------------------------------------------------------------------
def _make_kernel(BB, H, Hout, WC, K, N, Cconv, pad, KH, row_fold, act_norm):
    """K = KH*W*Cin (contraction dim), N = Wout*Cconv (lane-dense output dim)."""
    eps = 1e-5

    def kernel(x_ref, w_ref, b_ref, g_ref, be_ref, o_ref):
        # --- lane-dense patches: one (BB, Hout, W*Cin) row slab per kh --------
        # W-direction padding lives in the expanded weight; only the H halo
        # needs zero rows, built as values (no padded scratch, no duplicate
        # activation copy in VMEM, no whole-buffer zero fill).
        slabs = []
        for kh in range(KH):
            lo = kh - pad                     # first input row of this slab
            hi = lo + Hout
            top = max(0, -lo)                 # zero rows above
            bot = max(0, hi - H)              # zero rows below
            core = x_ref[:, max(lo, 0):min(hi, H), :]
            parts = []
            if top:
                parts.append(jnp.zeros((BB, top, WC), core.dtype))
            parts.append(core)
            if bot:
                parts.append(jnp.zeros((BB, bot, WC), core.dtype))
            slabs.append(parts[0] if len(parts) == 1
                         else jnp.concatenate(parts, axis=1))
        pat = slabs[0] if KH == 1 else jnp.concatenate(slabs, axis=-1)
        patches = pat.reshape(BB * Hout, K)   # leading-dim collapse only

        # --- one MXU matmul: bf16 x bf16 inputs, f32 accumulation -------------
        acc = jnp.dot(patches, w_ref[...], preferred_element_type=jnp.float32)
        acc = acc + b_ref[...]                # (BB*Hout, N) f32, per-lane bias
        y = acc.reshape(BB, Hout, N)          # leading split, no lane relayout

        if act_norm:
            # GroupNorm(2) in the (pre-shuffle) conv-output channel space:
            # lane index = ow*Cconv + co, group 0 is co < Cconv//2.
            half = Cconv // 2
            cnt = float(Hout * (N // Cconv) * half)   # elems / group / image
            colsum = jnp.sum(y, axis=1)               # (BB, N) row-reduce first
            colsq = jnp.sum(y * y, axis=1)            # (BB, N)
            lane = jax.lax.broadcasted_iota(jnp.int32, (1, N), 1)
            grp0 = (lane % Cconv) < half
            s_tot = jnp.sum(colsum, axis=1, keepdims=True)        # (BB, 1)
            q_tot = jnp.sum(colsq, axis=1, keepdims=True)
            s0 = jnp.sum(jnp.where(grp0, colsum, 0.0), axis=1, keepdims=True)
            q0 = jnp.sum(jnp.where(grp0, colsq, 0.0), axis=1, keepdims=True)
            s1, q1 = s_tot - s0, q_tot - q0           # group1 = total - group0
            m0, m1 = s0 / cnt, s1 / cnt
            # TODO(synk): E[x^2]-mean^2 (f32) is fine at these activation scales;
            # switch to a centered two-pass variance if conv outputs ever get a
            # large mean relative to std at production scales.
            v0 = jnp.maximum(q0 / cnt - m0 * m0, 0.0)
            v1 = jnp.maximum(q1 / cnt - m1 * m1, 0.0)
            mean = jnp.where(grp0, m0, m1)                        # (BB, N)
            inv = jnp.where(grp0, jax.lax.rsqrt(v0 + eps),
                            jax.lax.rsqrt(v1 + eps))
            y = (y - mean[:, None, :]) * inv[:, None, :] * g_ref[...] \
                + be_ref[...]
            y = y * jax.nn.sigmoid(y)          # SiLU

        if row_fold > 1:                       # keep the store lane-dense
            y = y.reshape(BB, Hout // row_fold, row_fold * N)
        o_ref[...] = y.astype(o_ref.dtype)     # bf16 writeback

    return kernel


# ----------------------------------------------------------------------------
# Wrapper helpers
# ----------------------------------------------------------------------------
def _expand_weight(w, W, Wout, pad):
    """(KH,KW,Cin,Cconv) -> (KH*W*Cin, Wout*Cconv), Toeplitz-expanded along W.

    Folds the conv's W sliding window and its zero padding into the weight so
    the kernel's patch matrix keeps a lane-dense (W*Cin) minor dim and the
    matmul output is directly the lane-dense (Wout*Cconv) layout.
    """
    KH, KW, Cin, Cconv = w.shape
    sel = np.zeros((W, Wout, KW), np.float32)
    for ow in range(Wout):
        for kw in range(KW):
            iw = ow + kw - pad
            if 0 <= iw < W:
                sel[iw, ow, kw] = 1.0
    we = jnp.einsum("xok,hkcd->hxcod", jnp.asarray(sel), w.astype(jnp.float32))
    return we.reshape(KH * W * Cin, Wout * Cconv)


def _n_grid_steps(batch):
    """2 'parallel' batch blocks only on 2-TensorCore chips (v7x); else 1."""
    try:
        kind = jax.devices()[0].device_kind.lower()
    except Exception:
        kind = ""
    two_tc = ("v7" in kind) or ("7x" in kind)
    return 2 if (two_tc and batch >= 2 and batch % 2 == 0) else 1


def pixel_shuffle_nhwc(x, r=2):
    """NHWC PixelShuffle matching torch.nn.PixelShuffle on NCHW."""
    B, H, W, C4 = x.shape
    C = C4 // (r * r)
    x = x.reshape(B, H, W, C, r, r)
    x = x.transpose(0, 1, 4, 2, 5, 3)   # B, H, i, W, j, C
    return x.reshape(B, H * r, W * r, C)


# ----------------------------------------------------------------------------
# BasicConv2d forward (Pallas path)
# ----------------------------------------------------------------------------
def basic_conv2d(x, w, b, gamma=None, beta=None, *, stride=1, padding=0,
                 dilation=1, upsampling=False, act_norm=False):
    """x: (B,H,W,Cin) f32 NHWC; w: (KH,KW,Cin,Cconv) HWIO. Returns bf16 NHWC."""
    # TODO(synk): stride>1 / dilation>1 conv not implemented (SimVP uses 1/1 here).
    assert stride == 1 and dilation == 1, "only stride=1, dilation=1 supported"

    B, H, W, Cin = x.shape
    KH, KW, Cin_w, Cconv = w.shape
    assert Cin_w == Cin
    pad = padding
    Hout = H + 2 * pad - KH + 1
    Wout = W + 2 * pad - KW + 1
    WC = W * Cin
    K = KH * WC
    N = Wout * Cconv

    # Per-lane (ow, co) parameter vectors (prepared once, host/XLA side).
    b_lane = jnp.tile(b.astype(jnp.float32), Wout).reshape(1, N)
    if act_norm:
        if upsampling:
            # GN(2)+SiLU commute with PixelShuffle(2) for PyTorch channel order;
            # normalize pre-shuffle with gamma/beta repeated 4x.
            assert Cconv % 8 == 0 and gamma.shape[0] * 4 == Cconv
            g_ch = jnp.repeat(gamma, 4)
            be_ch = jnp.repeat(beta, 4)
        else:
            assert Cconv % 2 == 0
            g_ch, be_ch = gamma, beta
        g_lane = jnp.tile(g_ch.astype(jnp.float32), Wout).reshape(1, N)
        be_lane = jnp.tile(be_ch.astype(jnp.float32), Wout).reshape(1, N)
    else:
        g_lane = jnp.ones((1, N), jnp.float32)
        be_lane = jnp.zeros((1, N), jnp.float32)

    # bf16 MXU inputs (f32 accumulation in-kernel); lane-dense layouts:
    #   x:      (B, H, W*Cin)                      (metadata-only reshape)
    #   weight: (KH*W*Cin, Wout*Cconv)             (Toeplitz-expanded along W)
    x_k = x.reshape(B, H, WC).astype(jnp.bfloat16)
    w_k = _expand_weight(w, W, Wout, pad).astype(jnp.bfloat16)

    # Lane-dense output: fold rows until the stored minor dim is >= 128 lanes.
    row_fold = 1
    while N * row_fold < 128 and Hout % (2 * row_fold) == 0:
        row_fold *= 2

    n_steps = _n_grid_steps(B)
    BB = B // n_steps

    kernel = _make_kernel(BB, H, Hout, WC, K, N, Cconv, pad, KH, row_fold,
                          act_norm)

    out = pl.pallas_call(
        kernel,
        out_shape=jax.ShapeDtypeStruct(
            (B, Hout // row_fold, row_fold * N), jnp.bfloat16),
        grid=(n_steps,),
        in_specs=[
            pl.BlockSpec((BB, H, WC), lambda i: (i, 0, 0)),
            pl.BlockSpec((K, N), lambda i: (0, 0)),
            pl.BlockSpec((1, N), lambda i: (0, 0)),
            pl.BlockSpec((1, N), lambda i: (0, 0)),
            pl.BlockSpec((1, N), lambda i: (0, 0)),
        ],
        out_specs=pl.BlockSpec((BB, Hout // row_fold, row_fold * N),
                               lambda i: (i, 0, 0)),
        compiler_params=pltpu.CompilerParams(
            dimension_semantics=("parallel",)),
    )(x_k, w_k, b_lane, g_lane, be_lane)

    y = out.reshape(B, Hout, Wout, Cconv)      # metadata-only reshape
    if upsampling:
        # Pure layout glue (single XLA transpose); GN+SiLU already applied
        # pre-shuffle inside the kernel.
        y = pixel_shuffle_nhwc(y, 2)
    return y


# ----------------------------------------------------------------------------
# Pure-JAX reference (mirrors the PyTorch module exactly, NHWC layout, f32)
# ----------------------------------------------------------------------------
def _ref_conv(x, w, b, pad):
    y = jax.lax.conv_general_dilated(
        x, w, window_strides=(1, 1), padding=[(pad, pad), (pad, pad)],
        dimension_numbers=("NHWC", "HWIO", "NHWC"))
    return y + b


def _ref_gn_silu(x, g, be, groups=2, eps=1e-5):
    B, H, W, C = x.shape
    xg = x.reshape(B, H, W, groups, C // groups)
    m = xg.mean(axis=(1, 2, 4), keepdims=True)
    v = jnp.mean((xg - m) ** 2, axis=(1, 2, 4), keepdims=True)
    xn = ((xg - m) * jax.lax.rsqrt(v + eps)).reshape(B, H, W, C)
    y = xn * g + be
    return y * jax.nn.sigmoid(y)


def basic_conv2d_reference(x, w, b, gamma, beta, *, padding, upsampling,
                           act_norm):
    y = _ref_conv(x, w, b, padding)
    if upsampling:
        y = pixel_shuffle_nhwc(y, 2)
    if act_norm:
        y = _ref_gn_silu(y, gamma, beta)
    return y


# ----------------------------------------------------------------------------
# Main
# ----------------------------------------------------------------------------
if __name__ == "__main__":
    B, C_in, C_out = 2, 8, 8
    H = W = 16

    keys = iter(jax.random.split(jax.random.PRNGKey(0), 32))

    def init_conv(kh, kw, cin, cout):
        fan_in = kh * kw * cin
        wv = jax.random.normal(next(keys), (kh, kw, cin, cout),
                               jnp.float32) / jnp.sqrt(fan_in)
        bv = 0.1 * jax.random.normal(next(keys), (cout,), jnp.float32)
        return wv, bv

    def init_gn(c):
        g = 1.0 + 0.1 * jax.random.normal(next(keys), (c,), jnp.float32)
        be = 0.1 * jax.random.normal(next(keys), (c,), jnp.float32)
        return g, be

    x = jax.random.normal(next(keys), (B, H, W, C_in), jnp.float32)   # NHWC

    configs = []
    # (1) SimVP up-layer: Conv(3x3, pad=1) -> PixelShuffle(2) -> GN(2) -> SiLU
    w1, b1 = init_conv(3, 3, C_in, C_out * 4)
    g1, be1 = init_gn(C_out)
    configs.append(dict(w=w1, b=b1, g=g1, be=be1, padding=1,
                        upsampling=True, act_norm=True))
    # (2) plain ConvSC block: Conv(3x3, pad=1) -> GN(2) -> SiLU
    w2, b2 = init_conv(3, 3, C_in, C_out)
    g2, be2 = init_gn(C_out)
    configs.append(dict(w=w2, b=b2, g=g2, be=be2, padding=1,
                        upsampling=False, act_norm=True))
    # (3) 1x1 readout: Conv(1x1, pad=0), no norm / activation
    w3, b3 = init_conv(1, 1, C_in, 4)
    configs.append(dict(w=w3, b=b3, g=None, be=None, padding=0,
                        upsampling=False, act_norm=False))

    for cfg in configs:
        out = basic_conv2d(x, cfg["w"], cfg["b"], cfg["g"], cfg["be"],
                           padding=cfg["padding"], upsampling=cfg["upsampling"],
                           act_norm=cfg["act_norm"])
        out = jax.block_until_ready(out).astype(jnp.float32)

        # (a) vs the exact f32 PyTorch-equivalent reference: tolerance covers
        #     bf16 input quantization + bf16 output writeback.
        ref = basic_conv2d_reference(x, cfg["w"], cfg["b"], cfg["g"], cfg["be"],
                                     padding=cfg["padding"],
                                     upsampling=cfg["upsampling"],
                                     act_norm=cfg["act_norm"])
        ref = jax.block_until_ready(ref)
        assert out.shape == ref.shape, (out.shape, ref.shape)
        err = float(jnp.max(jnp.abs(out - ref)))
        assert err < 5e-2, f"max abs error vs f32 reference: {err}"

        # (b) tighter check vs a bf16-input reference (f32 math): the remaining
        #     difference is essentially the bf16 output quantization.
        xq = x.astype(jnp.bfloat16).astype(jnp.float32)
        wq = cfg["w"].astype(jnp.bfloat16).astype(jnp.float32)
        ref_q = basic_conv2d_reference(xq, wq, cfg["b"], cfg["g"], cfg["be"],
                                       padding=cfg["padding"],
                                       upsampling=cfg["upsampling"],
                                       act_norm=cfg["act_norm"])
        ref_q = jax.block_until_ready(ref_q)
        err_q = float(jnp.max(jnp.abs(out - ref_q)))
        assert err_q < 3e-2, f"max abs error vs bf16-input reference: {err_q}"

    print("KERNEL_OK")
</pallas_src>

<mosaic_0001>
module attributes {stable_mosaic.version = 11 : i64} {
  func.func @kernel(%arg0: i32, %arg1: memref<2x16x128xbf16, #tpu.memory_space<vmem>>, %arg2: memref<384x512xbf16, #tpu.memory_space<vmem>>, %arg3: memref<1x512xf32, #tpu.memory_space<vmem>>, %arg4: memref<1x512xf32, #tpu.memory_space<vmem>>, %arg5: memref<1x512xf32, #tpu.memory_space<vmem>>, %arg6: memref<2x16x512xbf16, #tpu.memory_space<vmem>>) attributes {dimension_semantics = [#tpu.dimension_semantics<parallel>], iteration_bounds = array<i64: 1>, scalar_prefetch = 0 : i64, scratch_operands = 0 : i64, tpu.core_type = #tpu.core_type<tc>, window_params = [{transform_indices = @transform_0, window_bounds = array<i64: 2, 16, 128>}, {pipeline_mode = #tpu.pipeline_mode<synchronous>, transform_indices = @transform_1, window_bounds = array<i64: 384, 512>}, {pipeline_mode = #tpu.pipeline_mode<synchronous>, transform_indices = @transform_2, window_bounds = array<i64: 1, 512>}, {pipeline_mode = #tpu.pipeline_mode<synchronous>, transform_indices = @transform_3, window_bounds = array<i64: 1, 512>}, {pipeline_mode = #tpu.pipeline_mode<synchronous>, transform_indices = @transform_4, window_bounds = array<i64: 1, 512>}, {transform_indices = @transform_5, window_bounds = array<i64: 2, 16, 512>}]} {
    %c0 = arith.constant 0 : index
    %c0_0 = arith.constant 0 : index
    %c0_1 = arith.constant 0 : index
    %0 = vector.load %arg1[%c0, %c0_0, %c0_1] : memref<2x16x128xbf16, #tpu.memory_space<vmem>>, vector<2x15x128xbf16>
    %cst = arith.constant 0.000000e+00 : bf16
    %1 = vector.broadcast %cst : bf16 to vector<2x1x128xbf16>
    %2 = tpu.concatenate %1, %0 in 1 : vector<2x1x128xbf16>, vector<2x15x128xbf16> -> vector<2x16x128xbf16>
    %c0_2 = arith.constant 0 : index
    %c0_3 = arith.constant 0 : index
    %c0_4 = arith.constant 0 : index
    %3 = vector.load %arg1[%c0_2, %c0_3, %c0_4] : memref<2x16x128xbf16, #tpu.memory_space<vmem>>, vector<2x16x128xbf16>
    %c0_5 = arith.constant 0 : index
    %c1 = arith.constant 1 : index
    %c0_6 = arith.constant 0 : index
    %4 = vector.load %arg1[%c0_5, %c1, %c0_6] : memref<2x16x128xbf16, #tpu.memory_space<vmem>>, vector<2x15x128xbf16>
    %cst_7 = arith.constant 0.000000e+00 : bf16
    %5 = vector.broadcast %cst_7 : bf16 to vector<2x1x128xbf16>
    %6 = tpu.concatenate %4, %5 in 1 : vector<2x15x128xbf16>, vector<2x1x128xbf16> -> vector<2x16x128xbf16>
    %7 = tpu.concatenate %2, %3, %6 in 2 : vector<2x16x128xbf16>, vector<2x16x128xbf16>, vector<2x16x128xbf16> -> vector<2x16x384xbf16>
    %8 = vector.shape_cast %7 : vector<2x16x384xbf16> to vector<32x384xbf16>
    %c0_8 = arith.constant 0 : index
    %c0_9 = arith.constant 0 : index
    %9 = vector.load %arg2[%c0_8, %c0_9] : memref<384x512xbf16, #tpu.memory_space<vmem>>, vector<384x512xbf16>
    %cst_10 = arith.constant dense<0.000000e+00> : vector<32x512xf32>
    %10 = tpu.matmul %8, %9, %cst_10 {dimension_numbers = #tpu.dot_dimension_numbers<[1], [0], [0], [1], [0, 0, 1, 1], [], []>} : vector<32x384xbf16>, vector<384x512xbf16>, vector<32x512xf32> -> vector<32x512xf32>
    %c0_11 = arith.constant 0 : index
    %c0_12 = arith.constant 0 : index
    %11 = vector.load %arg3[%c0_11, %c0_12] : memref<1x512xf32, #tpu.memory_space<vmem>>, vector<1x512xf32>
    %12 = vector.broadcast %11 : vector<1x512xf32> to vector<32x512xf32>
    %13 = arith.addf %10, %12 : vector<32x512xf32>
    %14 = vector.shape_cast %13 : vector<32x512xf32> to vector<2x16x512xf32>
    %cst_13 = arith.constant dense<0.000000e+00> : vector<2x512xf32>
    %15 = vector.multi_reduction <add>, %14, %cst_13 [1] : vector<2x16x512xf32> to vector<2x512xf32>
    %16 = arith.mulf %14, %14 : vector<2x16x512xf32>
    %cst_14 = arith.constant dense<0.000000e+00> : vector<2x512xf32>
    %17 = vector.multi_reduction <add>, %16, %cst_14 [1] : vector<2x16x512xf32> to vector<2x512xf32>
    %18 = tpu.iota {dimensions = array<i32: 1>} : vector<1x512xi32>
    %c32_i32 = arith.constant 32 : i32
    %c0_i32 = arith.constant 0 : i32
    %19 = arith.cmpi eq, %c32_i32, %c0_i32 : i32
    %c1_i32 = arith.constant 1 : i32
    %20 = arith.select %19, %c1_i32, %c32_i32 : i32
    %21 = vector.broadcast %20 : i32 to vector<1x512xi32>
    %22 = arith.remsi %18, %21 : vector<1x512xi32>
    %c0_i32_15 = arith.constant 0 : i32
    %23 = vector.broadcast %c0_i32_15 : i32 to vector<1x512xi32>
    %24 = arith.cmpi ne, %22, %23 : vector<1x512xi32>
    %c0_i32_16 = arith.constant 0 : i32
    %25 = vector.broadcast %c0_i32_16 : i32 to vector<1x512xi32>
    %26 = arith.cmpi slt, %22, %25 : vector<1x512xi32>
    %c0_i32_17 = arith.constant 0 : i32
    %27 = arith.cmpi slt, %20, %c0_i32_17 : i32
    %28 = vector.broadcast %27 : i1 to vector<1x512xi1>
    %29 = vector.broadcast %28 : vector<1x512xi1> to vector<1x512xi1>
    %30 = arith.xori %26, %29 : vector<1x512xi1>
    %31 = arith.andi %30, %24 : vector<1x512xi1>
    %32 = vector.broadcast %20 : i32 to vector<1x512xi32>
    %33 = arith.addi %22, %32 : vector<1x512xi32>
    %34 = arith.select %31, %33, %22 : vector<1x512xi1>, vector<1x512xi32>
    %c16_i32 = arith.constant 16 : i32
    %35 = vector.broadcast %c16_i32 : i32 to vector<1x512xi32>
    %36 = arith.cmpi slt, %34, %35 : vector<1x512xi32>
    %cst_18 = arith.constant dense<0.000000e+00> : vector<2xf32>
    %37 = vector.multi_reduction <add>, %15, %cst_18 [1] : vector<2x512xf32> to vector<2xf32>
    %38 = vector.shape_cast %37 : vector<2xf32> to vector<2x1xf32>
    %cst_19 = arith.constant dense<0.000000e+00> : vector<2xf32>
    %39 = vector.multi_reduction <add>, %17, %cst_19 [1] : vector<2x512xf32> to vector<2xf32>
    %40 = vector.shape_cast %39 : vector<2xf32> to vector<2x1xf32>
    %cst_20 = arith.constant 0.000000e+00 : f32
    %41 = vector.shape_cast %36 : vector<1x512xi1> to vector<1x512xi1>
    %42 = vector.broadcast %41 : vector<1x512xi1> to vector<2x512xi1>
    %43 = vector.broadcast %cst_20 : f32 to vector<2x512xf32>
    %44 = arith.select %42, %15, %43 : vector<2x512xi1>, vector<2x512xf32>
    %cst_21 = arith.constant dense<0.000000e+00> : vector<2xf32>
    %45 = vector.multi_reduction <add>, %44, %cst_21 [1] : vector<2x512xf32> to vector<2xf32>
    %46 = vector.shape_cast %45 : vector<2xf32> to vector<2x1xf32>
    %cst_22 = arith.constant 0.000000e+00 : f32
    %47 = vector.shape_cast %36 : vector<1x512xi1> to vector<1x512xi1>
    %48 = vector.broadcast %47 : vector<1x512xi1> to vector<2x512xi1>
    %49 = vector.broadcast %cst_22 : f32 to vector<2x512xf32>
    %50 = arith.select %48, %17, %49 : vector<2x512xi1>, vector<2x512xf32>
    %cst_23 = arith.constant dense<0.000000e+00> : vector<2xf32>
    %51 = vector.multi_reduction <add>, %50, %cst_23 [1] : vector<2x512xf32> to vector<2xf32>
    %52 = vector.shape_cast %51 : vector<2xf32> to vector<2x1xf32>
    %53 = arith.subf %38, %46 : vector<2x1xf32>
    %54 = arith.subf %40, %52 : vector<2x1xf32>
    %cst_24 = arith.constant 4.096000e+03 : f32
    %55 = vector.broadcast %cst_24 : f32 to vector<2x1xf32>
    %56 = arith.divf %46, %55 : vector<2x1xf32>
    %cst_25 = arith.constant 4.096000e+03 : f32
    %57 = vector.broadcast %cst_25 : f32 to vector<2x1xf32>
    %58 = arith.divf %53, %57 : vector<2x1xf32>
    %cst_26 = arith.constant 4.096000e+03 : f32
    %59 = vector.broadcast %cst_26 : f32 to vector<2x1xf32>
    %60 = arith.divf %52, %59 : vector<2x1xf32>
    %61 = arith.mulf %56, %56 : vector<2x1xf32>
    %62 = arith.subf %60, %61 : vector<2x1xf32>
    %cst_27 = arith.constant 0.000000e+00 : f32
    %63 = vector.broadcast %cst_27 : f32 to vector<2x1xf32>
    %64 = arith.maximumf %62, %63 : vector<2x1xf32>
    %cst_28 = arith.constant 4.096000e+03 : f32
    %65 = vector.broadcast %cst_28 : f32 to vector<2x1xf32>
    %66 = arith.divf %54, %65 : vector<2x1xf32>
    %67 = arith.mulf %58, %58 : vector<2x1xf32>
    %68 = arith.subf %66, %67 : vector<2x1xf32>
    %cst_29 = arith.constant 0.000000e+00 : f32
    %69 = vector.broadcast %cst_29 : f32 to vector<2x1xf32>
    %70 = arith.maximumf %68, %69 : vector<2x1xf32>
    %71 = vector.shape_cast %36 : vector<1x512xi1> to vector<1x512xi1>
    %72 = vector.broadcast %71 : vector<1x512xi1> to vector<2x512xi1>
    %73 = vector.shape_cast %56 : vector<2x1xf32> to vector<2x1xf32>
    %74 = vector.broadcast %73 : vector<2x1xf32> to vector<2x512xf32>
    %75 = vector.shape_cast %58 : vector<2x1xf32> to vector<2x1xf32>
    %76 = vector.broadcast %75 : vector<2x1xf32> to vector<2x512xf32>
    %77 = arith.select %72, %74, %76 : vector<2x512xi1>, vector<2x512xf32>
    %cst_30 = arith.constant 9.99999974E-6 : f32
    %78 = vector.broadcast %cst_30 : f32 to vector<2x1xf32>
    %79 = arith.addf %64, %78 : vector<2x1xf32>
    %80 = math.rsqrt %79 : vector<2x1xf32>
    %cst_31 = arith.constant 9.99999974E-6 : f32
    %81 = vector.broadcast %cst_31 : f32 to vector<2x1xf32>
    %82 = arith.addf %70, %81 : vector<2x1xf32>
    %83 = math.rsqrt %82 : vector<2x1xf32>
    %84 = vector.shape_cast %36 : vector<1x512xi1> to vector<1x512xi1>
    %85 = vector.broadcast %84 : vector<1x512xi1> to vector<2x512xi1>
    %86 = vector.shape_cast %80 : vector<2x1xf32> to vector<2x1xf32>
    %87 = vector.broadcast %86 : vector<2x1xf32> to vector<2x512xf32>
    %88 = vector.shape_cast %83 : vector<2x1xf32> to vector<2x1xf32>
    %89 = vector.broadcast %88 : vector<2x1xf32> to vector<2x512xf32>
    %90 = arith.select %85, %87, %89 : vector<2x512xi1>, vector<2x512xf32>
    %91 = vector.shape_cast %77 : vector<2x512xf32> to vector<2x1x512xf32>
    %92 = vector.broadcast %91 : vector<2x1x512xf32> to vector<2x16x512xf32>
    %93 = arith.subf %14, %92 : vector<2x16x512xf32>
    %94 = vector.shape_cast %90 : vector<2x512xf32> to vector<2x1x512xf32>
    %95 = vector.broadcast %94 : vector<2x1x512xf32> to vector<2x16x512xf32>
    %96 = arith.mulf %93, %95 : vector<2x16x512xf32>
    %c0_32 = arith.constant 0 : index
    %c0_33 = arith.constant 0 : index
    %97 = vector.load %arg4[%c0_32, %c0_33] : memref<1x512xf32, #tpu.memory_space<vmem>>, vector<1x512xf32>
    %98 = vector.shape_cast %97 : vector<1x512xf32> to vector<1x1x512xf32>
    %99 = vector.broadcast %98 : vector<1x1x512xf32> to vector<2x16x512xf32>
    %100 = arith.mulf %96, %99 : vector<2x16x512xf32>
    %c0_34 = arith.constant 0 : index
    %c0_35 = arith.constant 0 : index
    %101 = vector.load %arg5[%c0_34, %c0_35] : memref<1x512xf32, #tpu.memory_space<vmem>>, vector<1x512xf32>
    %102 = vector.shape_cast %101 : vector<1x512xf32> to vector<1x1x512xf32>
    %103 = vector.broadcast %102 : vector<1x1x512xf32> to vector<2x16x512xf32>
    %104 = arith.addf %100, %103 : vector<2x16x512xf32>
    %105 = arith.negf %104 : vector<2x16x512xf32>
    %106 = math.exp %105 : vector<2x16x512xf32>
    %cst_36 = arith.constant 1.000000e+00 : f32
    %107 = vector.broadcast %cst_36 : f32 to vector<2x16x512xf32>
    %108 = arith.addf %107, %106 : vector<2x16x512xf32>
    %109 = arith.divf %107, %108 : vector<2x16x512xf32>
    %110 = arith.mulf %104, %109 : vector<2x16x512xf32>
    %111 = arith.truncf %110 : vector<2x16x512xf32> to vector<2x16x512xbf16>
    %c0_37 = arith.constant 0 : index
    %c0_38 = arith.constant 0 : index
    %c0_39 = arith.constant 0 : index
    %112 = vector.load %arg6[%c0_37, %c0_38, %c0_39] : memref<2x16x512xbf16, #tpu.memory_space<vmem>>, vector<2x16x512xbf16>
    tpu.vector_store %arg6[%c0_37, %c0_38, %c0_39], %111 {strides = array<i32>} : memref<2x16x512xbf16, #tpu.memory_space<vmem>>, vector<2x16x512xbf16>,
    return
  }
  func.func @transform_0(%arg0: i32) -> (i32, i32, i32) {
    %c0_i32 = arith.constant 0 : i32
    %c0_i32_0 = arith.constant 0 : i32
    %c0_i32_1 = arith.constant 0 : i32
    return %arg0, %c0_i32, %c0_i32_0 : i32, i32, i32
  }
  func.func @transform_1(%arg0: i32) -> (i32, i32) {
    %c0_i32 = arith.constant 0 : i32
    %c0_i32_0 = arith.constant 0 : i32
    %c0_i32_1 = arith.constant 0 : i32
    return %c0_i32, %c0_i32_0 : i32, i32
  }
  func.func @transform_2(%arg0: i32) -> (i32, i32) {
    %c0_i32 = arith.constant 0 : i32
    %c0_i32_0 = arith.constant 0 : i32
    %c0_i32_1 = arith.constant 0 : i32
    return %c0_i32, %c0_i32_0 : i32, i32
  }
  func.func @transform_3(%arg0: i32) -> (i32, i32) {
    %c0_i32 = arith.constant 0 : i32
    %c0_i32_0 = arith.constant 0 : i32
    %c0_i32_1 = arith.constant 0 : i32
    return %c0_i32, %c0_i32_0 : i32, i32
  }
  func.func @transform_4(%arg0: i32) -> (i32, i32) {
    %c0_i32 = arith.constant 0 : i32
    %c0_i32_0 = arith.constant 0 : i32
    %c0_i32_1 = arith.constant 0 : i32
    return %c0_i32, %c0_i32_0 : i32, i32
  }
  func.func @transform_5(%arg0: i32) -> (i32, i32, i32) {
    %c0_i32 = arith.constant 0 : i32
    %c0_i32_0 = arith.constant 0 : i32
    %c0_i32_1 = arith.constant 0 : i32
    return %arg0, %c0_i32, %c0_i32_0 : i32, i32, i32
  }
}

</mosaic_0001>

<llo_original>
// kernel: tpu_custom_call.1
$region0: #{tpu_custom_call.1}
  #allocation0 [shape = 'u32[]', space=smem, size = 0x4, offset = 0x4, fixed_abs, tag = 'smem constant byte address 0x4 - core index']
  #allocation1 [shape = 'u32[144,128]{1,0:T(1,128)}', space=vmem, size = 0x12000, scoped, tag = 'internal scratch']
  %s0 = inlined_call_operand.hbm [shape: bf16[2,16,128], index: 0, kind: input, shape index: {}]
  %s1 = inlined_call_operand.hbm [shape: bf16[384,512], index: 1, kind: input, shape index: {}]
  %s2 = inlined_call_operand.vmem [shape: f32[1,512], index: 2, kind: input, shape index: {}]
  %s3 = inlined_call_operand.vmem [shape: f32[1,512], index: 3, kind: input, shape index: {}]
  %s4 = inlined_call_operand.vmem [shape: f32[1,512], index: 4, kind: input, shape index: {}]
  %s5 = inlined_call_operand.hbm [shape: bf16[2,16,512], index: 5, kind: output, shape index: {}]
  %s6 = sld [smem:[#allocation0]]
  $region38: #{tpu_custom_call.1} parent=0
    _
  %s8 = ssub.s32 1, %s6
  %s9 = scalar_select 0, %s8, %s6
  $region1: #{tpu_custom_call.1} parent=0
    #allocation2 [shape = 'u8[8192]{0}', space=vmem, size = 0x2000, scoped, tag = 'input window, operand 0, single buffered']
    #allocation3 [shape = 's32[1]{0}', space=sflag, size = 0x4, scoped, tag = 'scoped memory for tpu_custom_call.1']
    #allocation4 [shape = 's32[1]{0}', space=sflag, size = 0x4, scoped, tag = 'scoped memory for tpu_custom_call.1']
    #allocation5 [shape = 'u8[393216]{0}', space=vmem, size = 0x60000, scoped, tag = 'input window, operand 1, single buffered']
    #allocation6 [shape = 's32[1]{0}', space=sflag, size = 0x4, scoped, tag = 'scoped memory for tpu_custom_call.1']
    #allocation7 [shape = 'u8[32768]{0}', space=vmem, size = 0x8000, scoped, tag = 'output window, operand 0, single buffered']
    %10 = vsyncpa [#allocation3], 0
    %11 = vsyncpa [#allocation6], 0
    %12 = vsyncpa [#allocation4], 0
    // Predicated region
    $region2: #{tpu_custom_call.1} parent=1 // pred_check
      _
    $region3: #{tpu_custom_call.1} parent=1 // pred_check_branch
      %14 = sbr.rel (0) target = $region5
    $region4: #{tpu_custom_call.1} parent=1 // pred_region
      %s16 = ssub.s32 256, 256
      %17 = vsyncadd [#allocation3], %s16
      %s18 = sshll.u32 [#allocation2], 4
      %s19 = int_to_ptr.vmem [resolvable:$true] %s18
      %24 = dma.hbm_to_vmem [thread:$0]  %s0, 256, %s19, [#allocation3], 64, 64, 4
    $region5: #{tpu_custom_call.1} parent=1 // pred_fallthru
      _
    // Predicated region
    $region6: #{tpu_custom_call.1} parent=1 // pred_check
      _
    $region7: #{tpu_custom_call.1} parent=1 // pred_check_branch
      %26 = sbr.rel (0) target = $region9
    $region8: #{tpu_custom_call.1} parent=1 // pred_region
      %s28 = ssub.s32 12288, 12288
      %29 = vsyncadd [#allocation6], %s28
      %s30 = sshll.u32 [#allocation5], 4
      %s31 = int_to_ptr.vmem [resolvable:$true] %s30
      %36 = dma.hbm_to_vmem [thread:$0]  %s1, 12288, %s31, [#allocation6], 256, 256, 16
    $region9: #{tpu_custom_call.1} parent=1 // pred_fallthru
      _
    // Predicated region
    $region10: #{tpu_custom_call.1} parent=1 // pred_check
      _
    $region11: #{tpu_custom_call.1} parent=1 // pred_check_branch
      %38 = sbr.rel (0) target = $region13
    $region12: #{tpu_custom_call.1} parent=1 // pred_region
      _
    $region13: #{tpu_custom_call.1} parent=1 // pred_fallthru
      _
    // Predicated region
    $region14: #{tpu_custom_call.1} parent=1 // pred_check
      _
    $region15: #{tpu_custom_call.1} parent=1 // pred_check_branch
      %40 = sbr.rel (0) target = $region17
    $region16: #{tpu_custom_call.1} parent=1 // pred_region
      _
    $region17: #{tpu_custom_call.1} parent=1 // pred_fallthru
      _
    // Predicated region
    $region18: #{tpu_custom_call.1} parent=1 // pred_check
      _
    $region19: #{tpu_custom_call.1} parent=1 // pred_check_branch
      %42 = sbr.rel (0) target = $region21
    $region20: #{tpu_custom_call.1} parent=1 // pred_region
      _
    $region21: #{tpu_custom_call.1} parent=1 // pred_fallthru
      _
    // Predicated region
    $region22: #{tpu_custom_call.1} parent=1 // pred_check
      _
    $region23: #{tpu_custom_call.1} parent=1 // pred_check_branch
      %44 = sbr.rel (0) target = $region25
    $region24: #{tpu_custom_call.1} parent=1 // pred_region
      %45 = dma.done [#allocation3], 256
    $region25: #{tpu_custom_call.1} parent=1 // pred_fallthru
      _
    // Predicated region
    $region26: #{tpu_custom_call.1} parent=1 // pred_check
      _
    $region27: #{tpu_custom_call.1} parent=1 // pred_check_branch
      %47 = sbr.rel (0) target = $region29
    $region28: #{tpu_custom_call.1} parent=1 // pred_region
      %48 = dma.done [#allocation6], 12288
    $region29: #{tpu_custom_call.1} parent=1 // pred_fallthru
      _
    %v50 = vld [vmem:[#allocation2] sm:$0xf]
    %v51 = vld [vmem:[#allocation2 + $0x4] sm:$0xf]
    %v52 = vld [vmem:[#allocation2 + $0x8] sm:$0xf]
    %v53 = vld [vmem:[#allocation2 + $0xc] sm:$0xf]
    %v58 = vunpack.c.l.b16 %v50
    %v59 = vunpack.c.l.b16 %v51
    %v60 = vunpack.c.l.b16 %v52
    %v61 = vunpack.c.l.b16 %v53
    %v62 = vpack.c.b16 %v59, %v58
    %v63 = vpack.c.b16 %v61, %v60
    %v65 = vshrl.u32 %v62, 16
    %v67 = vrot.slane %v65, 7
    %v68 = vshll.u32 %v62, 16
    %v70 = vor.u32 %v67, %v68
    %v72 = vshrl.u32 %v63, 16
    %v74 = vrot.slane %v72, 7
    %v75 = vshll.u32 %v63, 16
    %v77 = vor.u32 %v74, %v75
    %vm80 = vcmask 1040384
    %vm81 = vsmask.f32 256
    %vm82 = vmand %vm80, %vm81
    %v83 = vsel %vm82, 0, %v70
    %v84 = vsel %vm82, 0, %v77
    %v85 = vrot.slane %v68, 1
    %v86 = vor.u32 %v65, %v85
    %v87 = vrot.slane %v75, 1
    %v88 = vor.u32 %v72, %v87
    %vm91 = vcmask 1047552
    %vm92 = vsmask.f32 7424
    %vm93 = vmand %vm91, %vm92
    %v94 = vsel %vm93, %v86, 0
    %v95 = vsel %vm93, %v88, 0
    %v98 = vld [vmem:[#allocation5] sm:$0xff]
    %v99 = vld [vmem:[#allocation5 + $0x8] sm:$0xff]
    %v100 = vld [vmem:[#allocation5 + $0x10] sm:$0xff]
    %v101 = vld [vmem:[#allocation5 + $0x18] sm:$0xff]
    %v102 = vld [vmem:[#allocation5 + $0x20] sm:$0xff]
    %v103 = vld [vmem:[#allocation5 + $0x28] sm:$0xff]
    %v104 = vld [vmem:[#allocation5 + $0x30] sm:$0xff]
    %v105 = vld [vmem:[#allocation5 + $0x38] sm:$0xff]
    %v106 = vld [vmem:[#allocation5 + $0x40] sm:$0xff]
    %v107 = vld [vmem:[#allocation5 + $0x48] sm:$0xff]
    %v108 = vld [vmem:[#allocation5 + $0x50] sm:$0xff]
    %v109 = vld [vmem:[#allocation5 + $0x58] sm:$0xff]
    %v110 = vld [vmem:[#allocation5 + $0x60] sm:$0xff]
    %v111 = vld [vmem:[#allocation5 + $0x68] sm:$0xff]
    %v112 = vld [vmem:[#allocation5 + $0x70] sm:$0xff]
    %v113 = vld [vmem:[#allocation5 + $0x78] sm:$0xff]
    %v114 = vld [vmem:[#allocation5 + $0x80] sm:$0xff]
    %v115 = vld [vmem:[#allocation5 + $0x88] sm:$0xff]
    %v116 = vld [vmem:[#allocation5 + $0x90] sm:$0xff]
    %v117 = vld [vmem:[#allocation5 + $0x98] sm:$0xff]
    %v118 = vld [vmem:[#allocation5 + $0xa0] sm:$0xff]
    %v119 = vld [vmem:[#allocation5 + $0xa8] sm:$0xff]
    %v120 = vld [vmem:[#allocation5 + $0xb0] sm:$0xff]
    %v121 = vld [vmem:[#allocation5 + $0xb8] sm:$0xff]
    %v122 = vld [vmem:[#allocation5 + $0xc0] sm:$0xff]
    %v123 = vld [vmem:[#allocation5 + $0xc8] sm:$0xff]
    %v124 = vld [vmem:[#allocation5 + $0xd0] sm:$0xff]
    %v125 = vld [vmem:[#allocation5 + $0xd8] sm:$0xff]
    %v126 = vld [vmem:[#allocation5 + $0xe0] sm:$0xff]
    %v127 = vld [vmem:[#allocation5 + $0xe8] sm:$0xff]
    %v128 = vld [vmem:[#allocation5 + $0xf0] sm:$0xff]
    %v129 = vld [vmem:[#allocation5 + $0xf8] sm:$0xff]
    %v130 = vld [vmem:[#allocation5 + $0x100] sm:$0xff]
    %v131 = vld [vmem:[#allocation5 + $0x108] sm:$0xff]
    %v132 = vld [vmem:[#allocation5 + $0x110] sm:$0xff]
    %v133 = vld [vmem:[#allocation5 + $0x118] sm:$0xff]
    %v134 = vld [vmem:[#allocation5 + $0x120] sm:$0xff]
    %v135 = vld [vmem:[#allocation5 + $0x128] sm:$0xff]
    %v136 = vld [vmem:[#allocation5 + $0x130] sm:$0xff]
    %v137 = vld [vmem:[#allocation5 + $0x138] sm:$0xff]
    %v138 = vld [vmem:[#allocation5 + $0x140] sm:$0xff]
    %v139 = vld [vmem:[#allocation5 + $0x148] sm:$0xff]
    %v140 = vld [vmem:[#allocation5 + $0x150] sm:$0xff]
    %v141 = vld [vmem:[#allocation5 + $0x158] sm:$0xff]
    %v142 = vld [vmem:[#allocation5 + $0x160] sm:$0xff]
    %v143 = vld [vmem:[#allocation5 + $0x168] sm:$0xff]
    %v144 = vld [vmem:[#allocation5 + $0x170] sm:$0xff]
    %v145 = vld [vmem:[#allocation5 + $0x178] sm:$0xff]
    %v146 = vld [vmem:[#allocation5 + $0x180] sm:$0xff]
    %v147 = vld [vmem:[#allocation5 + $0x188] sm:$0xff]
    %v148 = vld [vmem:[#allocation5 + $0x190] sm:$0xff]
    %v149 = vld [vmem:[#allocation5 + $0x198] sm:$0xff]
    %v150 = vld [vmem:[#allocation5 + $0x1a0] sm:$0xff]
    %v151 = vld [vmem:[#allocation5 + $0x1a8] sm:$0xff]
    %v152 = vld [vmem:[#allocation5 + $0x1b0] sm:$0xff]
    %v153 = vld [vmem:[#allocation5 + $0x1b8] sm:$0xff]
    %v154 = vld [vmem:[#allocation5 + $0x1c0] sm:$0xff]
    %v155 = vld [vmem:[#allocation5 + $0x1c8] sm:$0xff]
    %v156 = vld [vmem:[#allocation5 + $0x1d0] sm:$0xff]
    %v157 = vld [vmem:[#allocation5 + $0x1d8] sm:$0xff]
    %v158 = vld [vmem:[#allocation5 + $0x1e0] sm:$0xff]
    %v159 = vld [vmem:[#allocation5 + $0x1e8] sm:$0xff]
    %v160 = vld [vmem:[#allocation5 + $0x1f0] sm:$0xff]
    %v161 = vld [vmem:[#allocation5 + $0x1f8] sm:$0xff]
    %v162 = vld [vmem:[#allocation5 + $0x200] sm:$0xff]
    %v163 = vld [vmem:[#allocation5 + $0x208] sm:$0xff]
    %v164 = vld [vmem:[#allocation5 + $0x210] sm:$0xff]
    %v165 = vld [vmem:[#allocation5 + $0x218] sm:$0xff]
    %v166 = vld [vmem:[#allocation5 + $0x220] sm:$0xff]
    %v167 = vld [vmem:[#allocation5 + $0x228] sm:$0xff]
    %v168 = vld [vmem:[#allocation5 + $0x230] sm:$0xff]
    %v169 = vld [vmem:[#allocation5 + $0x238] sm:$0xff]
    %v170 = vld [vmem:[#allocation5 + $0x240] sm:$0xff]
    %v171 = vld [vmem:[#allocation5 + $0x248] sm:$0xff]
    %v172 = vld [vmem:[#allocation5 + $0x250] sm:$0xff]
    %v173 = vld [vmem:[#allocation5 + $0x258] sm:$0xff]
    %v174 = vld [vmem:[#allocation5 + $0x260] sm:$0xff]
    %v175 = vld [vmem:[#allocation5 + $0x268] sm:$0xff]
    %v176 = vld [vmem:[#allocation5 + $0x270] sm:$0xff]
    %v177 = vld [vmem:[#allocation5 + $0x278] sm:$0xff]
    %v178 = vld [vmem:[#allocation5 + $0x280] sm:$0xff]
    %v179 = vld [vmem:[#allocation5 + $0x288] sm:$0xff]
    %v180 = vld [vmem:[#allocation5 + $0x290] sm:$0xff]
    %v181 = vld [vmem:[#allocation5 + $0x298] sm:$0xff]
    %v182 = vld [vmem:[#allocation5 + $0x2a0] sm:$0xff]
    %v183 = vld [vmem:[#allocation5 + $0x2a8] sm:$0xff]
    %v184 = vld [vmem:[#allocation5 + $0x2b0] sm:$0xff]
    %v185 = vld [vmem:[#allocation5 + $0x2b8] sm:$0xff]
    %v186 = vld [vmem:[#allocation5 + $0x2c0] sm:$0xff]
    %v187 = vld [vmem:[#allocation5 + $0x2c8] sm:$0xff]
    %v188 = vld [vmem:[#allocation5 + $0x2d0] sm:$0xff]
    %v189 = vld [vmem:[#allocation5 + $0x2d8] sm:$0xff]
    %v190 = vld [vmem:[#allocation5 + $0x2e0] sm:$0xff]
    %v191 = vld [vmem:[#allocation5 + $0x2e8] sm:$0xff]
    %v192 = vld [vmem:[#allocation5 + $0x2f0] sm:$0xff]
    %v193 = vld [vmem:[#allocation5 + $0x2f8] sm:$0xff]
    %v194 = vld [vmem:[%s2] sm:$0xf]
    %v196 = vlaneseq
    %v197 = vshrl.u32 %v196, 7
    %v198 = vsub.s32 0, %v197
    %v199 = vrot.slane %v194, %v198
    %v200 = vlaneseq
    %v201 = vshrl.u32 %v200, 7
    %v202 = vsub.s32 1, %v201
    %v203 = vrot.slane %v194, %v202
    %v204 = vlaneseq
    %v205 = vshrl.u32 %v204, 7
    %v206 = vsub.s32 2, %v205
    %v207 = vrot.slane %v194, %v206
    %v208 = vlaneseq
    %v209 = vshrl.u32 %v208, 7
    %v210 = vsub.s32 3, %v209
    %v211 = vrot.slane %v194, %v210
    %v312 = vunpack.c.l.b16 %v98
    %v313 = vunpack.c.h.b16 %v98
    %v314 = vunpack.c.l.b16 %v99
    %v315 = vunpack.c.h.b16 %v99
    %v316 = vunpack.c.l.b16 %v100
    %v317 = vunpack.c.h.b16 %v100
    %v318 = vunpack.c.l.b16 %v101
    %v319 = vunpack.c.h.b16 %v101
    %v320 = vunpack.c.l.b16 %v102
    %v321 = vunpack.c.h.b16 %v102
    %v322 = vunpack.c.l.b16 %v103
    %v323 = vunpack.c.h.b16 %v103
    %v324 = vunpack.c.l.b16 %v104
    %v325 = vunpack.c.h.b16 %v104
    %v326 = vunpack.c.l.b16 %v105
    %v327 = vunpack.c.h.b16 %v105
    %v328 = vunpack.c.l.b16 %v106
    %v329 = vunpack.c.h.b16 %v106
    %v330 = vunpack.c.l.b16 %v107
    %v331 = vunpack.c.h.b16 %v107
    %v332 = vunpack.c.l.b16 %v108
    %v333 = vunpack.c.h.b16 %v108
    %v334 = vunpack.c.l.b16 %v109
    %v335 = vunpack.c.h.b16 %v109
    %v336 = vunpack.c.l.b16 %v110
    %v337 = vunpack.c.h.b16 %v110
    %v338 = vunpack.c.l.b16 %v111
    %v339 = vunpack.c.h.b16 %v111
    %v340 = vunpack.c.l.b16 %v112
    %v341 = vunpack.c.h.b16 %v112
    %v342 = vunpack.c.l.b16 %v113
    %v343 = vunpack.c.h.b16 %v113
    %v344 = vunpack.c.l.b16 %v114
    %v345 = vunpack.c.h.b16 %v114
    %v346 = vunpack.c.l.b16 %v115
    %v347 = vunpack.c.h.b16 %v115
    %v348 = vunpack.c.l.b16 %v116
    %v349 = vunpack.c.h.b16 %v116
    %v350 = vunpack.c.l.b16 %v117
    %v351 = vunpack.c.h.b16 %v117
    %v352 = vunpack.c.l.b16 %v118
    %v353 = vunpack.c.h.b16 %v118
    %v354 = vunpack.c.l.b16 %v119
    %v355 = vunpack.c.h.b16 %v119
    %v356 = vunpack.c.l.b16 %v120
    %v357 = vunpack.c.h.b16 %v120
    %v358 = vunpack.c.l.b16 %v121
    %v359 = vunpack.c.h.b16 %v121
    %v360 = vunpack.c.l.b16 %v122
    %v361 = vunpack.c.h.b16 %v122
    %v362 = vunpack.c.l.b16 %v123
    %v363 = vunpack.c.h.b16 %v123
    %v364 = vunpack.c.l.b16 %v124
    %v365 = vunpack.c.h.b16 %v124
    %v366 = vunpack.c.l.b16 %v125
    %v367 = vunpack.c.h.b16 %v125
    %v368 = vunpack.c.l.b16 %v126
    %v369 = vunpack.c.h.b16 %v126
    %v370 = vunpack.c.l.b16 %v127
    %v371 = vunpack.c.h.b16 %v127
    %v372 = vunpack.c.l.b16 %v128
    %v373 = vunpack.c.h.b16 %v128
    %v374 = vunpack.c.l.b16 %v129
    %v375 = vunpack.c.h.b16 %v129
    %v376 = vunpack.c.l.b16 %v130
    %v377 = vunpack.c.h.b16 %v130
    %v378 = vunpack.c.l.b16 %v131
    %v379 = vunpack.c.h.b16 %v131
    %v380 = vunpack.c.l.b16 %v132
    %v381 = vunpack.c.h.b16 %v132
    %v382 = vunpack.c.l.b16 %v133
    %v383 = vunpack.c.h.b16 %v133
    %v384 = vunpack.c.l.b16 %v134
    %v385 = vunpack.c.h.b16 %v134
    %v386 = vunpack.c.l.b16 %v135
    %v387 = vunpack.c.h.b16 %v135
    %v388 = vunpack.c.l.b16 %v136
    %v389 = vunpack.c.h.b16 %v136
    %v390 = vunpack.c.l.b16 %v137
    %v391 = vunpack.c.h.b16 %v137
    %v392 = vunpack.c.l.b16 %v138
    %v393 = vunpack.c.h.b16 %v138
    %v394 = vunpack.c.l.b16 %v139
    %v395 = vunpack.c.h.b16 %v139
    %v396 = vunpack.c.l.b16 %v140
    %v397 = vunpack.c.h.b16 %v140
    %v398 = vunpack.c.l.b16 %v141
    %v399 = vunpack.c.h.b16 %v141
    %v400 = vunpack.c.l.b16 %v142
    %v401 = vunpack.c.h.b16 %v142
    %v402 = vunpack.c.l.b16 %v143
    %v403 = vunpack.c.h.b16 %v143
    %v404 = vunpack.c.l.b16 %v144
    %v405 = vunpack.c.h.b16 %v144
    %v406 = vunpack.c.l.b16 %v145
    %v407 = vunpack.c.h.b16 %v145
    %v408 = vunpack.c.l.b16 %v146
    %v409 = vunpack.c.h.b16 %v146
    %v410 = vunpack.c.l.b16 %v147
    %v411 = vunpack.c.h.b16 %v147
    %v412 = vunpack.c.l.b16 %v148
    %v413 = vunpack.c.h.b16 %v148
    %v414 = vunpack.c.l.b16 %v149
    %v415 = vunpack.c.h.b16 %v149
    %v416 = vunpack.c.l.b16 %v150
    %v417 = vunpack.c.h.b16 %v150
    %v418 = vunpack.c.l.b16 %v151
    %v419 = vunpack.c.h.b16 %v151
    %v420 = vunpack.c.l.b16 %v152
    %v421 = vunpack.c.h.b16 %v152
    %v422 = vunpack.c.l.b16 %v153
    %v423 = vunpack.c.h.b16 %v153
    %v424 = vunpack.c.l.b16 %v154
    %v425 = vunpack.c.h.b16 %v154
    %v426 = vunpack.c.l.b16 %v155
    %v427 = vunpack.c.h.b16 %v155
    %v428 = vunpack.c.l.b16 %v156
    %v429 = vunpack.c.h.b16 %v156
    %v430 = vunpack.c.l.b16 %v157
    %v431 = vunpack.c.h.b16 %v157
    %v432 = vunpack.c.l.b16 %v158
    %v433 = vunpack.c.h.b16 %v158
    %v434 = vunpack.c.l.b16 %v159
    %v435 = vunpack.c.h.b16 %v159
    %v436 = vunpack.c.l.b16 %v160
    %v437 = vunpack.c.h.b16 %v160
    %v438 = vunpack.c.l.b16 %v161
    %v439 = vunpack.c.h.b16 %v161
    %v440 = vunpack.c.l.b16 %v162
    %v441 = vunpack.c.h.b16 %v162
    %v442 = vunpack.c.l.b16 %v163
    %v443 = vunpack.c.h.b16 %v163
    %v444 = vunpack.c.l.b16 %v164
    %v445 = vunpack.c.h.b16 %v164
    %v446 = vunpack.c.l.b16 %v165
    %v447 = vunpack.c.h.b16 %v165
    %v448 = vunpack.c.l.b16 %v166
    %v449 = vunpack.c.h.b16 %v166
    %v450 = vunpack.c.l.b16 %v167
    %v451 = vunpack.c.h.b16 %v167
    %v452 = vunpack.c.l.b16 %v168
    %v453 = vunpack.c.h.b16 %v168
    %v454 = vunpack.c.l.b16 %v169
    %v455 = vunpack.c.h.b16 %v169
    %v456 = vunpack.c.l.b16 %v170
    %v457 = vunpack.c.h.b16 %v170
    %v458 = vunpack.c.l.b16 %v171
    %v459 = vunpack.c.h.b16 %v171
    %v460 = vunpack.c.l.b16 %v172
    %v461 = vunpack.c.h.b16 %v172
    %v462 = vunpack.c.l.b16 %v173
    %v463 = vunpack.c.h.b16 %v173
    %v464 = vunpack.c.l.b16 %v174
    %v465 = vunpack.c.h.b16 %v174
    %v466 = vunpack.c.l.b16 %v175
    %v467 = vunpack.c.h.b16 %v175
    %v468 = vunpack.c.l.b16 %v176
    %v469 = vunpack.c.h.b16 %v176
    %v470 = vunpack.c.l.b16 %v177
    %v471 = vunpack.c.h.b16 %v177
    %v472 = vunpack.c.l.b16 %v178
    %v473 = vunpack.c.h.b16 %v178
    %v474 = vunpack.c.l.b16 %v179
    %v475 = vunpack.c.h.b16 %v179
    %v476 = vunpack.c.l.b16 %v180
    %v477 = vunpack.c.h.b16 %v180
    %v478 = vunpack.c.l.b16 %v181
    %v479 = vunpack.c.h.b16 %v181
    %v480 = vunpack.c.l.b16 %v182
    %v481 = vunpack.c.h.b16 %v182
    %v482 = vunpack.c.l.b16 %v183
    %v483 = vunpack.c.h.b16 %v183
    %v484 = vunpack.c.l.b16 %v184
    %v485 = vunpack.c.h.b16 %v184
    %v486 = vunpack.c.l.b16 %v185
    %v487 = vunpack.c.h.b16 %v185
    %v488 = vunpack.c.l.b16 %v186
    %v489 = vunpack.c.h.b16 %v186
    %v490 = vunpack.c.l.b16 %v187
    %v491 = vunpack.c.h.b16 %v187
    %v492 = vunpack.c.l.b16 %v188
    %v493 = vunpack.c.h.b16 %v188
    %v494 = vunpack.c.l.b16 %v189
    %v495 = vunpack.c.h.b16 %v189
    %v496 = vunpack.c.l.b16 %v190
    %v497 = vunpack.c.h.b16 %v190
    %v498 = vunpack.c.l.b16 %v191
    %v499 = vunpack.c.h.b16 %v191
    %v500 = vunpack.c.l.b16 %v192
    %v501 = vunpack.c.h.b16 %v192
    %v502 = vunpack.c.l.b16 %v193
    %v503 = vunpack.c.h.b16 %v193
    %v504 = vpack.c.b16 %v316, %v312
    %v505 = vpack.c.b16 %v317, %v313
    %v506 = vpack.c.b16 %v318, %v314
    %v507 = vpack.c.b16 %v319, %v315
    %v508 = vpack.c.b16 %v324, %v320
    %v509 = vpack.c.b16 %v325, %v321
    %v510 = vpack.c.b16 %v326, %v322
    %v511 = vpack.c.b16 %v327, %v323
    %v512 = vpack.c.b16 %v332, %v328
    %v513 = vpack.c.b16 %v333, %v329
    %v514 = vpack.c.b16 %v334, %v330
    %v515 = vpack.c.b16 %v335, %v331
    %v516 = vpack.c.b16 %v340, %v336
    %v517 = vpack.c.b16 %v341, %v337
    %v518 = vpack.c.b16 %v342, %v338
    %v519 = vpack.c.b16 %v343, %v339
    %v520 = vpack.c.b16 %v348, %v344
    %v521 = vpack.c.b16 %v349, %v345
    %v522 = vpack.c.b16 %v350, %v346
    %v523 = vpack.c.b16 %v351, %v347
    %v524 = vpack.c.b16 %v356, %v352
    %v525 = vpack.c.b16 %v357, %v353
    %v526 = vpack.c.b16 %v358, %v354
    %v527 = vpack.c.b16 %v359, %v355
    %v528 = vpack.c.b16 %v364, %v360
    %v529 = vpack.c.b16 %v365, %v361
    %v530 = vpack.c.b16 %v366, %v362
    %v531 = vpack.c.b16 %v367, %v363
    %v532 = vpack.c.b16 %v372, %v368
    %v533 = vpack.c.b16 %v373, %v369
    %v534 = vpack.c.b16 %v374, %v370
    %v535 = vpack.c.b16 %v375, %v371
    %v536 = vpack.c.b16 %v380, %v376
    %v537 = vpack.c.b16 %v381, %v377
    %v538 = vpack.c.b16 %v382, %v378
    %v539 = vpack.c.b16 %v383, %v379
    %v540 = vpack.c.b16 %v388, %v384
    %v541 = vpack.c.b16 %v389, %v385
    %v542 = vpack.c.b16 %v390, %v386
    %v543 = vpack.c.b16 %v391, %v387
    %v544 = vpack.c.b16 %v396, %v392
    %v545 = vpack.c.b16 %v397, %v393
    %v546 = vpack.c.b16 %v398, %v394
    %v547 = vpack.c.b16 %v399, %v395
    %v548 = vpack.c.b16 %v404, %v400
    %v549 = vpack.c.b16 %v405, %v401
    %v550 = vpack.c.b16 %v406, %v402
    %v551 = vpack.c.b16 %v407, %v403
    %v552 = vpack.c.b16 %v412, %v408
    %v553 = vpack.c.b16 %v413, %v409
    %v554 = vpack.c.b16 %v414, %v410
    %v555 = vpack.c.b16 %v415, %v411
    %v556 = vpack.c.b16 %v420, %v416
    %v557 = vpack.c.b16 %v421, %v417
    %v558 = vpack.c.b16 %v422, %v418
    %v559 = vpack.c.b16 %v423, %v419
    %v560 = vpack.c.b16 %v428, %v424
    %v561 = vpack.c.b16 %v429, %v425
    %v562 = vpack.c.b16 %v430, %v426
    %v563 = vpack.c.b16 %v431, %v427
    %v564 = vpack.c.b16 %v436, %v432
    %v565 = vpack.c.b16 %v437, %v433
    %v566 = vpack.c.b16 %v438, %v434
    %v567 = vpack.c.b16 %v439, %v435
    %v568 = vpack.c.b16 %v444, %v440
    %v569 = vpack.c.b16 %v445, %v441
    %v570 = vpack.c.b16 %v446, %v442
    %v571 = vpack.c.b16 %v447, %v443
    %v572 = vpack.c.b16 %v452, %v448
    %v573 = vpack.c.b16 %v453, %v449
    %v574 = vpack.c.b16 %v454, %v450
    %v575 = vpack.c.b16 %v455, %v451
    %v576 = vpack.c.b16 %v460, %v456
    %v577 = vpack.c.b16 %v461, %v457
    %v578 = vpack.c.b16 %v462, %v458
    %v579 = vpack.c.b16 %v463, %v459
    %v580 = vpack.c.b16 %v468, %v464
    %v581 = vpack.c.b16 %v469, %v465
    %v582 = vpack.c.b16 %v470, %v466
    %v583 = vpack.c.b16 %v471, %v467
    %v584 = vpack.c.b16 %v476, %v472
    %v585 = vpack.c.b16 %v477, %v473
    %v586 = vpack.c.b16 %v478, %v474
    %v587 = vpack.c.b16 %v479, %v475
    %v588 = vpack.c.b16 %v484, %v480
    %v589 = vpack.c.b16 %v485, %v481
    %v590 = vpack.c.b16 %v486, %v482
    %v591 = vpack.c.b16 %v487, %v483
    %v592 = vpack.c.b16 %v492, %v488
    %v593 = vpack.c.b16 %v493, %v489
    %v594 = vpack.c.b16 %v494, %v490
    %v595 = vpack.c.b16 %v495, %v491
    %v596 = vpack.c.b16 %v500, %v496
    %v597 = vpack.c.b16 %v501, %v497
    %v598 = vpack.c.b16 %v502, %v498
    %v599 = vpack.c.b16 %v503, %v499
    %696 = vmatprep.subr.bf16.mxu0 %v505
    %697 = vmatpush1.bf16.msra.mxu0 %v504
    %698 = vmatprep.subr.bf16.mxu0 %v509
    %699 = vmatpush1.bf16.msra.mxu0 %v508
    %700 = vmatprep.subr.bf16.mxu0 %v513
    %701 = vmatpush1.bf16.msra.mxu0 %v512
    %702 = vmatprep.subr.bf16.mxu0 %v517
    %703 = vmatpush1.bf16.msra.mxu0 %v516
    %704 = vmatprep.subr.bf16.mxu0 %v521
    %705 = vmatpush1.bf16.msra.mxu0 %v520
    %706 = vmatprep.subr.bf16.mxu0 %v525
    %707 = vmatpush1.bf16.msra.mxu0 %v524
    %708 = vmatprep.subr.bf16.mxu0 %v529
    %709 = vmatpush1.bf16.msra.mxu0 %v528
    %710 = vmatprep.subr.bf16.mxu0 %v533
    %711 = vmatpush1.bf16.msra.mxu0 %v532
    %712 = vmatprep.subr.bf16.mxu0 %v537
    %713 = vmatpush1.bf16.msra.mxu0 %v536
    %714 = vmatprep.subr.bf16.mxu0 %v541
    %715 = vmatpush1.bf16.msra.mxu0 %v540
    %716 = vmatprep.subr.bf16.mxu0 %v545
    %717 = vmatpush1.bf16.msra.mxu0 %v544
    %718 = vmatprep.subr.bf16.mxu0 %v549
    %719 = vmatpush1.bf16.msra.mxu0 %v548
    %720 = vmatprep.subr.bf16.mxu0 %v553
    %721 = vmatpush1.bf16.msra.mxu0 %v552
    %722 = vmatprep.subr.bf16.mxu0 %v557
    %723 = vmatpush1.bf16.msra.mxu0 %v556
    %724 = vmatprep.subr.bf16.mxu0 %v561
    %725 = vmatpush1.bf16.msra.mxu0 %v560
    %726 = vmatprep.subr.bf16.mxu0 %v565
    %727 = vmatpush1.bf16.msra.mxu0 %v564
    %728 = vmatprep.mubr.bf16.mxu0 %v62
    %729 = vmatmul.mubr.bf16.gmra.mrb[0].mxu0 %v83
    %v730 = vpop.f32.mrb[0].mxu0
    %v731 = vadd.f32 %v199, %v730
    %v732 = vpop.f32.mrb[0].mxu0
    %v733 = vadd.f32 %v203, %v732
    %v734 = vpop.f32.mrb[0].mxu0
    %v735 = vadd.f32 %v199, %v734
    %v736 = vpop.f32.mrb[0].mxu0
    %v737 = vadd.f32 %v203, %v736
    %738 = vmatprep.mubr.bf16.mxu0 %v63
    %739 = vmatmul.mubr.bf16.gmra.mrb[0].mxu0 %v84
    %v740 = vpop.f32.mrb[0].mxu0
    %v741 = vadd.f32 %v199, %v740
    %v742 = vpop.f32.mrb[0].mxu0
    %v743 = vadd.f32 %v203, %v742
    %v744 = vpop.f32.mrb[0].mxu0
    %v745 = vadd.f32 %v199, %v744
    %v746 = vpop.f32.mrb[0].mxu0
    %v747 = vadd.f32 %v203, %v746
    %748 = vdwg.mxu0
    %749 = vmatprep.subr.bf16.mxu0 %v569
    %750 = vmatpush1.bf16.msra.mxu0 %v568
    %751 = vmatprep.subr.bf16.mxu0 %v573
    %752 = vmatpush1.bf16.msra.mxu0 %v572
    %753 = vmatprep.subr.bf16.mxu0 %v577
    %754 = vmatpush1.bf16.msra.mxu0 %v576
    %755 = vmatprep.subr.bf16.mxu0 %v581
    %756 = vmatpush1.bf16.msra.mxu0 %v580
    %757 = vmatprep.subr.bf16.mxu0 %v585
    %758 = vmatpush1.bf16.msra.mxu0 %v584
    %759 = vmatprep.subr.bf16.mxu0 %v589
    %760 = vmatpush1.bf16.msra.mxu0 %v588
    %761 = vmatprep.subr.bf16.mxu0 %v593
    %762 = vmatpush1.bf16.msra.mxu0 %v592
    %763 = vmatprep.subr.bf16.mxu0 %v597
    %764 = vmatpush1.bf16.msra.mxu0 %v596
    %765 = vmatprep.subr.bf16.mxu0 0
    %766 = vmatpush1.bf16.msra.mxu0 0
    %767 = vmatprep.subr.bf16.mxu0 0
    %768 = vmatpush1.bf16.msra.mxu0 0
    %769 = vmatprep.subr.bf16.mxu0 0
    %770 = vmatpush1.bf16.msra.mxu0 0
    %771 = vmatprep.subr.bf16.mxu0 0
    %772 = vmatpush1.bf16.msra.mxu0 0
    %773 = vmatprep.subr.bf16.mxu0 0
    %774 = vmatpush1.bf16.msra.mxu0 0
    %775 = vmatprep.subr.bf16.mxu0 0
    %776 = vmatpush1.bf16.msra.mxu0 0
    %777 = vmatprep.subr.bf16.mxu0 0
    %778 = vmatpush1.bf16.msra.mxu0 0
    %779 = vmatprep.subr.bf16.mxu0 0
    %780 = vmatpush1.bf16.msra.mxu0 0
    %781 = vmatprep.mubr.bf16.mxu0 0
    %782 = vmatmul.mubr.bf16.gmra.mrb[0].mxu0 %v94
    %v783 = vpop.f32.mrb[0].mxu0
    %v784 = vadd.f32 %v731, %v783
    %v785 = vpop.f32.mrb[0].mxu0
    %v786 = vadd.f32 %v733, %v785
    %v787 = vpop.f32.mrb[0].mxu0
    %v788 = vadd.f32 %v735, %v787
    %v789 = vpop.f32.mrb[0].mxu0
    %v790 = vadd.f32 %v737, %v789
    %791 = vmatprep.mubr.bf16.mxu0 0
    %792 = vmatmul.mubr.bf16.gmra.mrb[0].mxu0 %v95
    %v793 = vpop.f32.mrb[0].mxu0
    %v794 = vadd.f32 %v741, %v793
    %v795 = vpop.f32.mrb[0].mxu0
    %v796 = vadd.f32 %v743, %v795
    %v797 = vpop.f32.mrb[0].mxu0
    %v798 = vadd.f32 %v745, %v797
    %v799 = vpop.f32.mrb[0].mxu0
    %v800 = vadd.f32 %v747, %v799
    %801 = vdwg.mxu0
    %802 = vmatprep.subr.bf16.mxu0 %v507
    %803 = vmatpush1.bf16.msra.mxu0 %v506
    %804 = vmatprep.subr.bf16.mxu0 %v511
    %805 = vmatpush1.bf16.msra.mxu0 %v510
    %806 = vmatprep.subr.bf16.mxu0 %v515
    %807 = vmatpush1.bf16.msra.mxu0 %v514
    %808 = vmatprep.subr.bf16.mxu0 %v519
    %809 = vmatpush1.bf16.msra.mxu0 %v518
    %810 = vmatprep.subr.bf16.mxu0 %v523
    %811 = vmatpush1.bf16.msra.mxu0 %v522
    %812 = vmatprep.subr.bf16.mxu0 %v527
    %813 = vmatpush1.bf16.msra.mxu0 %v526
    %814 = vmatprep.subr.bf16.mxu0 %v531
    %815 = vmatpush1.bf16.msra.mxu0 %v530
    %816 = vmatprep.subr.bf16.mxu0 %v535
    %817 = vmatpush1.bf16.msra.mxu0 %v534
    %818 = vmatprep.subr.bf16.mxu0 %v539
    %819 = vmatpush1.bf16.msra.mxu0 %v538
    %820 = vmatprep.subr.bf16.mxu0 %v543
    %821 = vmatpush1.bf16.msra.mxu0 %v542
    %822 = vmatprep.subr.bf16.mxu0 %v547
    %823 = vmatpush1.bf16.msra.mxu0 %v546
    %824 = vmatprep.subr.bf16.mxu0 %v551
    %825 = vmatpush1.bf16.msra.mxu0 %v550
    %826 = vmatprep.subr.bf16.mxu0 %v555
    %827 = vmatpush1.bf16.msra.mxu0 %v554
    %828 = vmatprep.subr.bf16.mxu0 %v559
    %829 = vmatpush1.bf16.msra.mxu0 %v558
    %830 = vmatprep.subr.bf16.mxu0 %v563
    %831 = vmatpush1.bf16.msra.mxu0 %v562
    %832 = vmatprep.subr.bf16.mxu0 %v567
    %833 = vmatpush1.bf16.msra.mxu0 %v566
    %834 = vmatprep.mubr.bf16.mxu0 %v62
    %835 = vmatmul.mubr.bf16.gmra.mrb[0].mxu0 %v83
    %v836 = vpop.f32.mrb[0].mxu0
    %v837 = vadd.f32 %v207, %v836
    %v838 = vpop.f32.mrb[0].mxu0
    %v839 = vadd.f32 %v211, %v838
    %v840 = vpop.f32.mrb[0].mxu0
    %v841 = vadd.f32 %v207, %v840
    %v842 = vpop.f32.mrb[0].mxu0
    %v843 = vadd.f32 %v211, %v842
    %844 = vmatprep.mubr.bf16.mxu0 %v63
    %845 = vmatmul.mubr.bf16.gmra.mrb[0].mxu0 %v84
    %v846 = vpop.f32.mrb[0].mxu0
    %v847 = vadd.f32 %v207, %v846
    %v848 = vpop.f32.mrb[0].mxu0
    %v849 = vadd.f32 %v211, %v848
    %v850 = vpop.f32.mrb[0].mxu0
    %v851 = vadd.f32 %v207, %v850
    %v852 = vpop.f32.mrb[0].mxu0
    %v853 = vadd.f32 %v211, %v852
    %854 = vdwg.mxu0
    %855 = vmatprep.subr.bf16.mxu0 %v571
    %856 = vmatpush1.bf16.msra.mxu0 %v570
    %857 = vmatprep.subr.bf16.mxu0 %v575
    %858 = vmatpush1.bf16.msra.mxu0 %v574
    %859 = vmatprep.subr.bf16.mxu0 %v579
    %860 = vmatpush1.bf16.msra.mxu0 %v578
    %861 = vmatprep.subr.bf16.mxu0 %v583
    %862 = vmatpush1.bf16.msra.mxu0 %v582
    %863 = vmatprep.subr.bf16.mxu0 %v587
    %864 = vmatpush1.bf16.msra.mxu0 %v586
    %865 = vmatprep.subr.bf16.mxu0 %v591
    %866 = vmatpush1.bf16.msra.mxu0 %v590
    %867 = vmatprep.subr.bf16.mxu0 %v595
    %868 = vmatpush1.bf16.msra.mxu0 %v594
    %869 = vmatprep.subr.bf16.mxu0 %v599
    %870 = vmatpush1.bf16.msra.mxu0 %v598
    %871 = vmatprep.subr.bf16.mxu0 0
    %872 = vmatpush1.bf16.msra.mxu0 0
    %873 = vmatprep.subr.bf16.mxu0 0
    %874 = vmatpush1.bf16.msra.mxu0 0
    %875 = vmatprep.subr.bf16.mxu0 0
    %876 = vmatpush1.bf16.msra.mxu0 0
    %877 = vmatprep.subr.bf16.mxu0 0
    %878 = vmatpush1.bf16.msra.mxu0 0
    %879 = vmatprep.subr.bf16.mxu0 0
    %880 = vmatpush1.bf16.msra.mxu0 0
    %881 = vmatprep.subr.bf16.mxu0 0
    %882 = vmatpush1.bf16.msra.mxu0 0
    %883 = vmatprep.subr.bf16.mxu0 0
    %884 = vmatpush1.bf16.msra.mxu0 0
    %885 = vmatprep.subr.bf16.mxu0 0
    %886 = vmatpush1.bf16.msra.mxu0 0
    %887 = vmatprep.mubr.bf16.mxu0 0
    %888 = vmatmul.mubr.bf16.gmra.mrb[0].mxu0 %v94
    %v889 = vpop.f32.mrb[0].mxu0
    %v890 = vadd.f32 %v837, %v889
    %v891 = vpop.f32.mrb[0].mxu0
    %v892 = vadd.f32 %v839, %v891
    %v893 = vpop.f32.mrb[0].mxu0
    %v894 = vadd.f32 %v841, %v893
    %v895 = vpop.f32.mrb[0].mxu0
    %v896 = vadd.f32 %v843, %v895
    %897 = vmatprep.mubr.bf16.mxu0 0
    %898 = vmatmul.mubr.bf16.gmra.mrb[0].mxu0 %v95
    %v899 = vpop.f32.mrb[0].mxu0
    %v900 = vadd.f32 %v847, %v899
    %v901 = vpop.f32.mrb[0].mxu0
    %v902 = vadd.f32 %v849, %v901
    %v903 = vpop.f32.mrb[0].mxu0
    %v904 = vadd.f32 %v851, %v903
    %v905 = vpop.f32.mrb[0].mxu0
    %v906 = vadd.f32 %v853, %v905
    %907 = vdwg.mxu0
    %v908 = vadd.f32 %v784, %v788
    %v909 = vrot.slane %v908, 4
    %v910 = vadd.f32 %v908, %v909
    %v911 = vrot.slane %v910, 2
    %v912 = vadd.f32 %v910, %v911
    %v913 = vrot.slane %v912, 1
    %v914 = vadd.f32 %v912, %v913
    %v915 = vadd.f32 %v786, %v790
    %v916 = vrot.slane %v915, 4
    %v917 = vadd.f32 %v915, %v916
    %v918 = vrot.slane %v917, 2
    %v919 = vadd.f32 %v917, %v918
    %v920 = vrot.slane %v919, 1
    %v921 = vadd.f32 %v919, %v920
    %v922 = vadd.f32 %v890, %v894
    %v923 = vrot.slane %v922, 4
    %v924 = vadd.f32 %v922, %v923
    %v925 = vrot.slane %v924, 2
    %v926 = vadd.f32 %v924, %v925
    %v927 = vrot.slane %v926, 1
    %v928 = vadd.f32 %v926, %v927
    %v929 = vadd.f32 %v892, %v896
    %v930 = vrot.slane %v929, 4
    %v931 = vadd.f32 %v929, %v930
    %v932 = vrot.slane %v931, 2
    %v933 = vadd.f32 %v931, %v932
    %v934 = vrot.slane %v933, 1
    %v935 = vadd.f32 %v933, %v934
    %v936 = vadd.f32 %v794, %v798
    %v937 = vrot.slane %v936, 4
    %v938 = vadd.f32 %v936, %v937
    %v939 = vrot.slane %v938, 2
    %v940 = vadd.f32 %v938, %v939
    %v941 = vrot.slane %v940, 1
    %v942 = vadd.f32 %v940, %v941
    %v943 = vadd.f32 %v796, %v800
    %v944 = vrot.slane %v943, 4
    %v945 = vadd.f32 %v943, %v944
    %v946 = vrot.slane %v945, 2
    %v947 = vadd.f32 %v945, %v946
    %v948 = vrot.slane %v947, 1
    %v949 = vadd.f32 %v947, %v948
    %v950 = vadd.f32 %v900, %v904
    %v951 = vrot.slane %v950, 4
    %v952 = vadd.f32 %v950, %v951
    %v953 = vrot.slane %v952, 2
    %v954 = vadd.f32 %v952, %v953
    %v955 = vrot.slane %v954, 1
    %v956 = vadd.f32 %v954, %v955
    %v957 = vadd.f32 %v902, %v906
    %v958 = vrot.slane %v957, 4
    %v959 = vadd.f32 %v957, %v958
    %v960 = vrot.slane %v959, 2
    %v961 = vadd.f32 %v959, %v960
    %v962 = vrot.slane %v961, 1
    %v963 = vadd.f32 %v961, %v962
    %v964 = vmul.f32 %v784, %v784
    %v965 = vmul.f32 %v786, %v786
    %v966 = vmul.f32 %v890, %v890
    %v967 = vmul.f32 %v892, %v892
    %v968 = vmul.f32 %v788, %v788
    %v969 = vmul.f32 %v790, %v790
    %v970 = vmul.f32 %v894, %v894
    %v971 = vmul.f32 %v896, %v896
    %v972 = vmul.f32 %v794, %v794
    %v973 = vmul.f32 %v796, %v796
    %v974 = vmul.f32 %v900, %v900
    %v975 = vmul.f32 %v902, %v902
    %v976 = vmul.f32 %v798, %v798
    %v977 = vmul.f32 %v800, %v800
    %v978 = vmul.f32 %v904, %v904
    %v979 = vmul.f32 %v906, %v906
    %v980 = vadd.f32 %v964, %v968
    %v981 = vrot.slane %v980, 4
    %v982 = vadd.f32 %v980, %v981
    %v983 = vrot.slane %v982, 2
    %v984 = vadd.f32 %v982, %v983
    %v985 = vrot.slane %v984, 1
    %v986 = vadd.f32 %v984, %v985
    %v987 = vadd.f32 %v965, %v969
    %v988 = vrot.slane %v987, 4
    %v989 = vadd.f32 %v987, %v988
    %v990 = vrot.slane %v989, 2
    %v991 = vadd.f32 %v989, %v990
    %v992 = vrot.slane %v991, 1
    %v993 = vadd.f32 %v991, %v992
    %v994 = vadd.f32 %v966, %v970
    %v995 = vrot.slane %v994, 4
    %v996 = vadd.f32 %v994, %v995
    %v997 = vrot.slane %v996, 2
    %v998 = vadd.f32 %v996, %v997
    %v999 = vrot.slane %v998, 1
    %v1000 = vadd.f32 %v998, %v999
    %v1001 = vadd.f32 %v967, %v971
    %v1002 = vrot.slane %v1001, 4
    %v1003 = vadd.f32 %v1001, %v1002
    %v1004 = vrot.slane %v1003, 2
    %v1005 = vadd.f32 %v1003, %v1004
    %v1006 = vrot.slane %v1005, 1
    %v1007 = vadd.f32 %v1005, %v1006
    %v1008 = vadd.f32 %v972, %v976
    %v1009 = vrot.slane %v1008, 4
    %v1010 = vadd.f32 %v1008, %v1009
    %v1011 = vrot.slane %v1010, 2
    %v1012 = vadd.f32 %v1010, %v1011
    %v1013 = vrot.slane %v1012, 1
    %v1014 = vadd.f32 %v1012, %v1013
    %v1015 = vadd.f32 %v973, %v977
    %v1016 = vrot.slane %v1015, 4
    %v1017 = vadd.f32 %v1015, %v1016
    %v1018 = vrot.slane %v1017, 2
    %v1019 = vadd.f32 %v1017, %v1018
    %v1020 = vrot.slane %v1019, 1
    %v1021 = vadd.f32 %v1019, %v1020
    %v1022 = vadd.f32 %v974, %v978
    %v1023 = vrot.slane %v1022, 4
    %v1024 = vadd.f32 %v1022, %v1023
    %v1025 = vrot.slane %v1024, 2
    %v1026 = vadd.f32 %v1024, %v1025
    %v1027 = vrot.slane %v1026, 1
    %v1028 = vadd.f32 %v1026, %v1027
    %v1029 = vadd.f32 %v975, %v979
    %v1030 = vrot.slane %v1029, 4
    %v1031 = vadd.f32 %v1029, %v1030
    %v1032 = vrot.slane %v1031, 2
    %v1033 = vadd.f32 %v1031, %v1032
    %v1034 = vrot.slane %v1033, 1
    %v1035 = vadd.f32 %v1033, %v1034
    %v1036 = vlaneseq
    %v1037 = vand.u32 %v1036, 127
    %v1038 = vadd.s32 %v1037, 128
    %v1039 = vadd.s32 %v1037, 256
    %v1040 = vadd.s32 %v1037, 384
    %vm1041 = vcmp.lt.s32.totalorder %v1037, 0
    %v1042 = vsub.s32 0, %v1037
    %v1043 = vsel %vm1041, %v1042, %v1037
    %v1044 = vshrl.u32 %v1043, 5
    %v1045 = vand.u32 %v1043, 31
    %v1046 = vsub.s32 0, %v1045
    %v1047 = vsel %vm1041, %v1046, %v1045
    %vm1048 = vcmp.lt.s32.totalorder %v1038, 0
    %v1049 = vsub.s32 0, %v1038
    %v1050 = vsel %vm1048, %v1049, %v1038
    %v1051 = vshrl.u32 %v1050, 5
    %v1052 = vand.u32 %v1050, 31
    %v1053 = vsub.s32 0, %v1052
    %v1054 = vsel %vm1048, %v1053, %v1052
    %vm1055 = vcmp.lt.s32.totalorder %v1039, 0
    %v1056 = vsub.s32 0, %v1039
    %v1057 = vsel %vm1055, %v1056, %v1039
    %v1058 = vshrl.u32 %v1057, 5
    %v1059 = vand.u32 %v1057, 31
    %v1060 = vsub.s32 0, %v1059
    %v1061 = vsel %vm1055, %v1060, %v1059
    %vm1062 = vcmp.lt.s32.totalorder %v1040, 0
    %v1063 = vsub.s32 0, %v1040
    %v1064 = vsel %vm1062, %v1063, %v1040
    %v1065 = vshrl.u32 %v1064, 5
    %v1066 = vand.u32 %v1064, 31
    %v1067 = vsub.s32 0, %v1066
    %v1068 = vsel %vm1062, %v1067, %v1066
    %vm1069 = vcmp.ne.s32.totalorder %v1047, 0
    %vm1070 = vcmp.ne.s32.totalorder %v1054, 0
    %vm1071 = vcmp.ne.s32.totalorder %v1061, 0
    %vm1072 = vcmp.ne.s32.totalorder %v1068, 0
    %vm1073 = vcmp.lt.s32.totalorder %v1047, 0
    %vm1074 = vcmp.lt.s32.totalorder %v1054, 0
    %vm1075 = vcmp.lt.s32.totalorder %v1061, 0
    %vm1076 = vcmp.lt.s32.totalorder %v1068, 0
    %vm1077 = vmand %vm1073, %vm1069
    %vm1078 = vmand %vm1074, %vm1070
    %vm1079 = vmand %vm1075, %vm1071
    %vm1080 = vmand %vm1076, %vm1072
    %v1081 = vadd.s32 %v1047, 32
    %v1082 = vadd.s32 %v1054, 32
    %v1083 = vadd.s32 %v1061, 32
    %v1084 = vadd.s32 %v1068, 32
    %v1085 = vsel %vm1077, %v1081, %v1047
    %v1086 = vsel %vm1078, %v1082, %v1054
    %v1087 = vsel %vm1079, %v1083, %v1061
    %v1088 = vsel %vm1080, %v1084, %v1068
    %vm1089 = vcmp.lt.s32.totalorder %v1085, 16
    %vm1090 = vcmp.lt.s32.totalorder %v1086, 16
    %vm1091 = vcmp.lt.s32.totalorder %v1087, 16
    %vm1092 = vcmp.lt.s32.totalorder %v1088, 16
    %vm1101 = vcmask 1041409
    %v1102 = vsel %vm1101, %v942, %v914
    %v1103 = vsel %vm1101, %v949, %v921
    %v1104 = vsel %vm1101, %v956, %v928
    %v1105 = vsel %vm1101, %v963, %v935
    %vm1110 = vcmask 1041408
    %v1111 = vsel %vm1110, %v1102, 0.0
    %v1112 = vsel %vm1110, %v1103, 0.0
    %v1113 = vadd.f32 %v1111, %v1112
    %v1114 = vsel %vm1110, %v1104, 0.0
    %v1115 = vadd.f32 %v1113, %v1114
    %v1116 = vsel %vm1110, %v1105, 0.0
    %v1117 = vadd.f32 %v1115, %v1116
    %1118 = vadd.xlane.f32.xlu0 %v1117
    %v1119 = vpop.xlane.xlu0 %1118
    %v1128 = vsel %vm1101, %v1014, %v986
    %v1129 = vsel %vm1101, %v1021, %v993
    %v1130 = vsel %vm1101, %v1028, %v1000
    %v1131 = vsel %vm1101, %v1035, %v1007
    %v1136 = vsel %vm1110, %v1128, 0.0
    %v1137 = vsel %vm1110, %v1129, 0.0
    %v1138 = vadd.f32 %v1136, %v1137
    %v1139 = vsel %vm1110, %v1130, 0.0
    %v1140 = vadd.f32 %v1138, %v1139
    %v1141 = vsel %vm1110, %v1131, 0.0
    %v1142 = vadd.f32 %v1140, %v1141
    %1143 = vadd.xlane.f32.xlu0 %v1142
    %v1144 = vpop.xlane.xlu0 %1143
    %v1145 = vsel %vm1089, 1, 0
    %v1146 = vsel %vm1090, 1, 0
    %v1147 = vsel %vm1091, 1, 0
    %v1148 = vsel %vm1092, 1, 0
    %vm1149 = vcmp.eq.s32.totalorder %v1145, 1
    %vm1150 = vcmp.eq.s32.totalorder %v1146, 1
    %vm1151 = vcmp.eq.s32.totalorder %v1147, 1
    %vm1152 = vcmp.eq.s32.totalorder %v1148, 1
    %v1153 = vsel %vm1149, %v1102, 0.0
    %v1154 = vsel %vm1150, %v1103, 0.0
    %v1155 = vsel %vm1151, %v1104, 0.0
    %v1156 = vsel %vm1152, %v1105, 0.0
    %v1157 = vsel %vm1110, %v1153, 0.0
    %v1158 = vsel %vm1110, %v1154, 0.0
    %v1159 = vadd.f32 %v1157, %v1158
    %v1160 = vsel %vm1110, %v1155, 0.0
    %v1161 = vadd.f32 %v1159, %v1160
    %v1162 = vsel %vm1110, %v1156, 0.0
    %v1163 = vadd.f32 %v1161, %v1162
    %1164 = vadd.xlane.f32.xlu0 %v1163
    %v1165 = vpop.xlane.xlu0 %1164
    %v1166 = vsel %vm1149, %v1128, 0.0
    %v1167 = vsel %vm1150, %v1129, 0.0
    %v1168 = vsel %vm1151, %v1130, 0.0
    %v1169 = vsel %vm1152, %v1131, 0.0
    %v1170 = vsel %vm1110, %v1166, 0.0
    %v1171 = vsel %vm1110, %v1167, 0.0
    %v1172 = vadd.f32 %v1170, %v1171
    %v1173 = vsel %vm1110, %v1168, 0.0
    %v1174 = vadd.f32 %v1172, %v1173
    %v1175 = vsel %vm1110, %v1169, 0.0
    %v1176 = vadd.f32 %v1174, %v1175
    %1177 = vadd.xlane.f32.xlu0 %v1176
    %v1178 = vpop.xlane.xlu0 %1177
    %v1179 = vsub.f32 %v1119, %v1165
    %v1180 = vsub.f32 %v1144, %v1178
    %v1181 = vrcp.pop 4096.0
    %v1182 = vmul.f32 %v1165, %v1181
    %v1183 = vmul.f32 %v1179, %v1181
    %v1184 = vmul.f32 %v1178, %v1181
    %v1185 = vmul.f32 %v1182, %v1182
    %v1186 = vsub.f32 %v1184, %v1185
    %v1187 = vmax.f32 %v1186, 0.0
    %v1188 = vmul.f32 %v1180, %v1181
    %v1189 = vmul.f32 %v1183, %v1183
    %v1190 = vsub.f32 %v1188, %v1189
    %v1191 = vmax.f32 %v1190, 0.0
    %v1192 = vsel %vm1149, %v1182, %v1183
    %v1193 = vsel %vm1150, %v1182, %v1183
    %v1194 = vsel %vm1151, %v1182, %v1183
    %v1195 = vsel %vm1152, %v1182, %v1183
    %v1196 = vadd.f32 %v1187, 1e-05
    %v1197 = vrsqrt.pop %v1196
    %v1198 = vadd.f32 %v1191, 1e-05
    %v1199 = vrsqrt.pop %v1198
    %v1200 = vsel %vm1149, %v1197, %v1199
    %v1201 = vsel %vm1150, %v1197, %v1199
    %v1202 = vsel %vm1151, %v1197, %v1199
    %v1203 = vsel %vm1152, %v1197, %v1199
    %v1208 = vcombine.low %v1192, %v1193
    %v1209 = vcombine.low %v1194, %v1195
    %v1211 = vunpack.c.l.s4 1966171168
    %v1212 = vunpack.c.0.s8 %v1211
    %v1213 = vlaneseq
    %v1214 = vshrl.u32 %v1213, 7
    %v1215 = vsub.s32 %v1212, %v1214
    %v1216 = vrot.slane %v1208, %v1215
    %v1218 = vunpack.c.l.s4 1966171168
    %v1219 = vunpack.c.0.s8 %v1218
    %v1220 = vlaneseq
    %v1221 = vshrl.u32 %v1220, 7
    %v1222 = vsub.s32 %v1219, %v1221
    %v1223 = vrot.slane %v1209, %v1222
    %v1224 = vcombine.low %v1216, %v1223
    %v1225 = vcombine.high %v1216, %v1223
    %v1227 = vunpack.c.l.s4 1966171168
    %v1228 = vunpack.c.0.s8 %v1227
    %v1229 = vlaneseq
    %v1230 = vshrl.u32 %v1229, 7
    %v1231 = vsub.s32 %v1228, %v1230
    %v1232 = vrot.slane %v1224, %v1231
    %v1234 = vunpack.c.l.s4 1966171168
    %v1235 = vunpack.c.0.s8 %v1234
    %v1236 = vlaneseq
    %v1237 = vshrl.u32 %v1236, 7
    %v1238 = vsub.s32 %v1235, %v1237
    %v1239 = vrot.slane %v1225, %v1238
    %v1240 = vlaneseq
    %v1241 = vshrl.u32 %v1240, 7
    %v1242 = vsub.s32 0, %v1241
    %v1243 = vrot.slane %v1232, %v1242
    %v1244 = vlaneseq
    %v1245 = vshrl.u32 %v1244, 7
    %v1246 = vsub.s32 1, %v1245
    %v1247 = vrot.slane %v1232, %v1246
    %v1248 = vlaneseq
    %v1249 = vshrl.u32 %v1248, 7
    %v1250 = vsub.s32 2, %v1249
    %v1251 = vrot.slane %v1232, %v1250
    %v1252 = vlaneseq
    %v1253 = vshrl.u32 %v1252, 7
    %v1254 = vsub.s32 3, %v1253
    %v1255 = vrot.slane %v1232, %v1254
    %v1256 = vlaneseq
    %v1257 = vshrl.u32 %v1256, 7
    %v1258 = vsub.s32 0, %v1257
    %v1259 = vrot.slane %v1239, %v1258
    %v1260 = vlaneseq
    %v1261 = vshrl.u32 %v1260, 7
    %v1262 = vsub.s32 1, %v1261
    %v1263 = vrot.slane %v1239, %v1262
    %v1264 = vlaneseq
    %v1265 = vshrl.u32 %v1264, 7
    %v1266 = vsub.s32 2, %v1265
    %v1267 = vrot.slane %v1239, %v1266
    %v1268 = vlaneseq
    %v1269 = vshrl.u32 %v1268, 7
    %v1270 = vsub.s32 3, %v1269
    %v1271 = vrot.slane %v1239, %v1270
    %v1280 = vsub.f32 %v784, %v1243
    %v1281 = vsub.f32 %v786, %v1247
    %v1282 = vsub.f32 %v890, %v1251
    %v1283 = vsub.f32 %v892, %v1255
    %v1284 = vsub.f32 %v788, %v1243
    %v1285 = vsub.f32 %v790, %v1247
    %v1286 = vsub.f32 %v894, %v1251
    %v1287 = vsub.f32 %v896, %v1255
    %v1288 = vsub.f32 %v794, %v1259
    %v1289 = vsub.f32 %v796, %v1263
    %v1290 = vsub.f32 %v900, %v1267
    %v1291 = vsub.f32 %v902, %v1271
    %v1292 = vsub.f32 %v798, %v1259
    %v1293 = vsub.f32 %v800, %v1263
    %v1294 = vsub.f32 %v904, %v1267
    %v1295 = vsub.f32 %v906, %v1271
    %v1300 = vcombine.low %v1200, %v1201
    %v1301 = vcombine.low %v1202, %v1203
    %v1303 = vunpack.c.l.s4 1966171168
    %v1304 = vunpack.c.0.s8 %v1303
    %v1305 = vlaneseq
    %v1306 = vshrl.u32 %v1305, 7
    %v1307 = vsub.s32 %v1304, %v1306
    %v1308 = vrot.slane %v1300, %v1307
    %v1310 = vunpack.c.l.s4 1966171168
    %v1311 = vunpack.c.0.s8 %v1310
    %v1312 = vlaneseq
    %v1313 = vshrl.u32 %v1312, 7
    %v1314 = vsub.s32 %v1311, %v1313
    %v1315 = vrot.slane %v1301, %v1314
    %v1316 = vcombine.low %v1308, %v1315
    %v1317 = vcombine.high %v1308, %v1315
    %v1319 = vunpack.c.l.s4 1966171168
    %v1320 = vunpack.c.0.s8 %v1319
    %v1321 = vlaneseq
    %v1322 = vshrl.u32 %v1321, 7
    %v1323 = vsub.s32 %v1320, %v1322
    %v1324 = vrot.slane %v1316, %v1323
    %v1326 = vunpack.c.l.s4 1966171168
    %v1327 = vunpack.c.0.s8 %v1326
    %v1328 = vlaneseq
    %v1329 = vshrl.u32 %v1328, 7
    %v1330 = vsub.s32 %v1327, %v1329
    %v1331 = vrot.slane %v1317, %v1330
    %v1332 = vlaneseq
    %v1333 = vshrl.u32 %v1332, 7
    %v1334 = vsub.s32 0, %v1333
    %v1335 = vrot.slane %v1324, %v1334
    %v1336 = vlaneseq
    %v1337 = vshrl.u32 %v1336, 7
    %v1338 = vsub.s32 1, %v1337
    %v1339 = vrot.slane %v1324, %v1338
    %v1340 = vlaneseq
    %v1341 = vshrl.u32 %v1340, 7
    %v1342 = vsub.s32 2, %v1341
    %v1343 = vrot.slane %v1324, %v1342
    %v1344 = vlaneseq
    %v1345 = vshrl.u32 %v1344, 7
    %v1346 = vsub.s32 3, %v1345
    %v1347 = vrot.slane %v1324, %v1346
    %v1348 = vlaneseq
    %v1349 = vshrl.u32 %v1348, 7
    %v1350 = vsub.s32 0, %v1349
    %v1351 = vrot.slane %v1331, %v1350
    %v1352 = vlaneseq
    %v1353 = vshrl.u32 %v1352, 7
    %v1354 = vsub.s32 1, %v1353
    %v1355 = vrot.slane %v1331, %v1354
    %v1356 = vlaneseq
    %v1357 = vshrl.u32 %v1356, 7
    %v1358 = vsub.s32 2, %v1357
    %v1359 = vrot.slane %v1331, %v1358
    %v1360 = vlaneseq
    %v1361 = vshrl.u32 %v1360, 7
    %v1362 = vsub.s32 3, %v1361
    %v1363 = vrot.slane %v1331, %v1362
    %v1372 = vmul.f32 %v1280, %v1335
    %v1373 = vmul.f32 %v1281, %v1339
    %v1374 = vmul.f32 %v1282, %v1343
    %v1375 = vmul.f32 %v1283, %v1347
    %v1376 = vmul.f32 %v1284, %v1335
    %v1377 = vmul.f32 %v1285, %v1339
    %v1378 = vmul.f32 %v1286, %v1343
    %v1379 = vmul.f32 %v1287, %v1347
    %v1380 = vmul.f32 %v1288, %v1351
    %v1381 = vmul.f32 %v1289, %v1355
    %v1382 = vmul.f32 %v1290, %v1359
    %v1383 = vmul.f32 %v1291, %v1363
    %v1384 = vmul.f32 %v1292, %v1351
    %v1385 = vmul.f32 %v1293, %v1355
    %v1386 = vmul.f32 %v1294, %v1359
    %v1387 = vmul.f32 %v1295, %v1363
    %v1388 = vld [vmem:[%s3] sm:$0xf]
    %v1390 = vlaneseq
    %v1391 = vshrl.u32 %v1390, 7
    %v1392 = vsub.s32 0, %v1391
    %v1393 = vrot.slane %v1388, %v1392
    %v1394 = vlaneseq
    %v1395 = vshrl.u32 %v1394, 7
    %v1396 = vsub.s32 1, %v1395
    %v1397 = vrot.slane %v1388, %v1396
    %v1398 = vlaneseq
    %v1399 = vshrl.u32 %v1398, 7
    %v1400 = vsub.s32 2, %v1399
    %v1401 = vrot.slane %v1388, %v1400
    %v1402 = vlaneseq
    %v1403 = vshrl.u32 %v1402, 7
    %v1404 = vsub.s32 3, %v1403
    %v1405 = vrot.slane %v1388, %v1404
    %v1410 = vmul.f32 %v1372, %v1393
    %v1411 = vmul.f32 %v1373, %v1397
    %v1412 = vmul.f32 %v1374, %v1401
    %v1413 = vmul.f32 %v1375, %v1405
    %v1414 = vmul.f32 %v1376, %v1393
    %v1415 = vmul.f32 %v1377, %v1397
    %v1416 = vmul.f32 %v1378, %v1401
    %v1417 = vmul.f32 %v1379, %v1405
    %v1418 = vmul.f32 %v1380, %v1393
    %v1419 = vmul.f32 %v1381, %v1397
    %v1420 = vmul.f32 %v1382, %v1401
    %v1421 = vmul.f32 %v1383, %v1405
    %v1422 = vmul.f32 %v1384, %v1393
    %v1423 = vmul.f32 %v1385, %v1397
    %v1424 = vmul.f32 %v1386, %v1401
    %v1425 = vmul.f32 %v1387, %v1405
    %v1426 = vld [vmem:[%s4] sm:$0xf]
    %v1428 = vlaneseq
    %v1429 = vshrl.u32 %v1428, 7
    %v1430 = vsub.s32 0, %v1429
    %v1431 = vrot.slane %v1426, %v1430
    %v1432 = vlaneseq
    %v1433 = vshrl.u32 %v1432, 7
    %v1434 = vsub.s32 1, %v1433
    %v1435 = vrot.slane %v1426, %v1434
    %v1436 = vlaneseq
    %v1437 = vshrl.u32 %v1436, 7
    %v1438 = vsub.s32 2, %v1437
    %v1439 = vrot.slane %v1426, %v1438
    %v1440 = vlaneseq
    %v1441 = vshrl.u32 %v1440, 7
    %v1442 = vsub.s32 3, %v1441
    %v1443 = vrot.slane %v1426, %v1442
    %v1448 = vadd.f32 %v1410, %v1431
    %v1449 = vadd.f32 %v1411, %v1435
    %v1450 = vadd.f32 %v1412, %v1439
    %v1451 = vadd.f32 %v1413, %v1443
    %v1452 = vadd.f32 %v1414, %v1431
    %v1453 = vadd.f32 %v1415, %v1435
    %v1454 = vadd.f32 %v1416, %v1439
    %v1455 = vadd.f32 %v1417, %v1443
    %v1456 = vadd.f32 %v1418, %v1431
    %v1457 = vadd.f32 %v1419, %v1435
    %v1458 = vadd.f32 %v1420, %v1439
    %v1459 = vadd.f32 %v1421, %v1443
    %v1460 = vadd.f32 %v1422, %v1431
    %v1461 = vadd.f32 %v1423, %v1435
    %v1462 = vadd.f32 %v1424, %v1439
    %v1463 = vadd.f32 %v1425, %v1443
    %v1464 = vxor.u32 %v1448, 2147483648
    %v1465 = vxor.u32 %v1449, 2147483648
    %v1466 = vxor.u32 %v1450, 2147483648
    %v1467 = vxor.u32 %v1451, 2147483648
    %v1468 = vxor.u32 %v1452, 2147483648
    %v1469 = vxor.u32 %v1453, 2147483648
    %v1470 = vxor.u32 %v1454, 2147483648
    %v1471 = vxor.u32 %v1455, 2147483648
    %v1472 = vxor.u32 %v1456, 2147483648
    %v1473 = vxor.u32 %v1457, 2147483648
    %v1474 = vxor.u32 %v1458, 2147483648
    %v1475 = vxor.u32 %v1459, 2147483648
    %v1476 = vxor.u32 %v1460, 2147483648
    %v1477 = vxor.u32 %v1461, 2147483648
    %v1478 = vxor.u32 %v1462, 2147483648
    %v1479 = vxor.u32 %v1463, 2147483648
    %v1480 = vmul.f32 %v1464, 1.442695
    %v1481 = vpow.pop %v1480
    %v1482 = vmul.f32 %v1465, 1.442695
    %v1483 = vpow.pop %v1482
    %v1484 = vmul.f32 %v1466, 1.442695
    %v1485 = vpow.pop %v1484
    %v1486 = vmul.f32 %v1467, 1.442695
    %v1487 = vpow.pop %v1486
    %v1488 = vmul.f32 %v1468, 1.442695
    %v1489 = vpow.pop %v1488
    %v1490 = vmul.f32 %v1469, 1.442695
    %v1491 = vpow.pop %v1490
    %v1492 = vmul.f32 %v1470, 1.442695
    %v1493 = vpow.pop %v1492
    %v1494 = vmul.f32 %v1471, 1.442695
    %v1495 = vpow.pop %v1494
    %v1496 = vmul.f32 %v1472, 1.442695
    %v1497 = vpow.pop %v1496
    %v1498 = vmul.f32 %v1473, 1.442695
    %v1499 = vpow.pop %v1498
    %v1500 = vmul.f32 %v1474, 1.442695
    %v1501 = vpow.pop %v1500
    %v1502 = vmul.f32 %v1475, 1.442695
    %v1503 = vpow.pop %v1502
    %v1504 = vmul.f32 %v1476, 1.442695
    %v1505 = vpow.pop %v1504
    %v1506 = vmul.f32 %v1477, 1.442695
    %v1507 = vpow.pop %v1506
    %v1508 = vmul.f32 %v1478, 1.442695
    %v1509 = vpow.pop %v1508
    %v1510 = vmul.f32 %v1479, 1.442695
    %v1511 = vpow.pop %v1510
    %v1512 = vadd.f32 %v1481, 1.0
    %v1513 = vadd.f32 %v1483, 1.0
    %v1514 = vadd.f32 %v1485, 1.0
    %v1515 = vadd.f32 %v1487, 1.0
    %v1516 = vadd.f32 %v1489, 1.0
    %v1517 = vadd.f32 %v1491, 1.0
    %v1518 = vadd.f32 %v1493, 1.0
    %v1519 = vadd.f32 %v1495, 1.0
    %v1520 = vadd.f32 %v1497, 1.0
    %v1521 = vadd.f32 %v1499, 1.0
    %v1522 = vadd.f32 %v1501, 1.0
    %v1523 = vadd.f32 %v1503, 1.0
    %v1524 = vadd.f32 %v1505, 1.0
    %v1525 = vadd.f32 %v1507, 1.0
    %v1526 = vadd.f32 %v1509, 1.0
    %v1527 = vadd.f32 %v1511, 1.0
    %v1528 = vrcp.pop %v1512
    %v1529 = vmul.f32 1.0, %v1528
    %v1530 = vrcp.pop %v1513
    %v1531 = vmul.f32 1.0, %v1530
    %v1532 = vrcp.pop %v1514
    %v1533 = vmul.f32 1.0, %v1532
    %v1534 = vrcp.pop %v1515
    %v1535 = vmul.f32 1.0, %v1534
    %v1536 = vrcp.pop %v1516
    %v1537 = vmul.f32 1.0, %v1536
    %v1538 = vrcp.pop %v1517
    %v1539 = vmul.f32 1.0, %v1538
    %v1540 = vrcp.pop %v1518
    %v1541 = vmul.f32 1.0, %v1540
    %v1542 = vrcp.pop %v1519
    %v1543 = vmul.f32 1.0, %v1542
    %v1544 = vrcp.pop %v1520
    %v1545 = vmul.f32 1.0, %v1544
    %v1546 = vrcp.pop %v1521
    %v1547 = vmul.f32 1.0, %v1546
    %v1548 = vrcp.pop %v1522
    %v1549 = vmul.f32 1.0, %v1548
    %v1550 = vrcp.pop %v1523
    %v1551 = vmul.f32 1.0, %v1550
    %v1552 = vrcp.pop %v1524
    %v1553 = vmul.f32 1.0, %v1552
    %v1554 = vrcp.pop %v1525
    %v1555 = vmul.f32 1.0, %v1554
    %v1556 = vrcp.pop %v1526
    %v1557 = vmul.f32 1.0, %v1556
    %v1558 = vrcp.pop %v1527
    %v1559 = vmul.f32 1.0, %v1558
    %v1560 = vmul.f32 %v1448, %v1529
    %v1561 = vmul.f32 %v1449, %v1531
    %v1562 = vmul.f32 %v1450, %v1533
    %v1563 = vmul.f32 %v1451, %v1535
    %v1564 = vmul.f32 %v1452, %v1537
    %v1565 = vmul.f32 %v1453, %v1539
    %v1566 = vmul.f32 %v1454, %v1541
    %v1567 = vmul.f32 %v1455, %v1543
    %v1568 = vmul.f32 %v1456, %v1545
    %v1569 = vmul.f32 %v1457, %v1547
    %v1570 = vmul.f32 %v1458, %v1549
    %v1571 = vmul.f32 %v1459, %v1551
    %v1572 = vmul.f32 %v1460, %v1553
    %v1573 = vmul.f32 %v1461, %v1555
    %v1574 = vmul.f32 %v1462, %v1557
    %v1575 = vmul.f32 %v1463, %v1559
    %v1576 = vpack.c.bf16 %v1564, %v1560
    %v1577 = vpack.c.bf16 %v1565, %v1561
    %v1578 = vpack.c.bf16 %v1566, %v1562
    %v1579 = vpack.c.bf16 %v1567, %v1563
    %v1580 = vpack.c.bf16 %v1572, %v1568
    %v1581 = vpack.c.bf16 %v1573, %v1569
    %v1582 = vpack.c.bf16 %v1574, %v1570
    %v1583 = vpack.c.bf16 %v1575, %v1571
    %v1592 = vunpack.c.l.b16 %v1576
    %v1593 = vunpack.c.l.b16 %v1577
    %v1594 = vunpack.c.l.b16 %v1578
    %v1595 = vunpack.c.l.b16 %v1579
    %v1596 = vunpack.c.h.b16 %v1576
    %v1597 = vunpack.c.h.b16 %v1577
    %v1598 = vunpack.c.h.b16 %v1578
    %v1599 = vunpack.c.h.b16 %v1579
    %v1600 = vunpack.c.l.b16 %v1580
    %v1601 = vunpack.c.l.b16 %v1581
    %v1602 = vunpack.c.l.b16 %v1582
    %v1603 = vunpack.c.l.b16 %v1583
    %v1604 = vunpack.c.h.b16 %v1580
    %v1605 = vunpack.c.h.b16 %v1581
    %v1606 = vunpack.c.h.b16 %v1582
    %v1607 = vunpack.c.h.b16 %v1583
    %v1608 = vpack.c.b16 %v1593, %v1592
    %v1609 = vpack.c.b16 %v1595, %v1594
    %v1610 = vpack.c.b16 %v1597, %v1596
    %v1611 = vpack.c.b16 %v1599, %v1598
    %v1612 = vpack.c.b16 %v1601, %v1600
    %v1613 = vpack.c.b16 %v1603, %v1602
    %v1614 = vpack.c.b16 %v1605, %v1604
    %v1615 = vpack.c.b16 %v1607, %v1606
    %1624 = vst [vmem:[#allocation7] sm:$0xff] %v1608
    %1625 = vst [vmem:[#allocation7 + $0x8] sm:$0xff] %v1609
    %1626 = vst [vmem:[#allocation7 + $0x10] sm:$0xff] %v1610
    %1627 = vst [vmem:[#allocation7 + $0x18] sm:$0xff] %v1611
    %1628 = vst [vmem:[#allocation7 + $0x20] sm:$0xff] %v1612
    %1629 = vst [vmem:[#allocation7 + $0x28] sm:$0xff] %v1613
    %1630 = vst [vmem:[#allocation7 + $0x30] sm:$0xff] %v1614
    %1631 = vst [vmem:[#allocation7 + $0x38] sm:$0xff] %v1615
    // Predicated region
    $region30: #{tpu_custom_call.1} parent=1 // pred_check
      _
    $region31: #{tpu_custom_call.1} parent=1 // pred_check_branch
      %1633 = sbr.rel (0) target = $region33
    $region32: #{tpu_custom_call.1} parent=1 // pred_region
      %s1635 = ssub.s32 1024, 1024
      %1636 = vsyncadd [#allocation4], %s1635
      %s1637 = sshll.u32 [#allocation7], 4
      %s1638 = int_to_ptr.vmem [resolvable:$true] %s1637
      %1643 = dma.vmem_to_hbm [thread:$0]  %s1638, 1024, %s5, [#allocation4], 256, 256, 16
    $region33: #{tpu_custom_call.1} parent=1 // pred_fallthru
      _
    // Predicated region
    $region34: #{tpu_custom_call.1} parent=1 // pred_check
      _
    $region35: #{tpu_custom_call.1} parent=1 // pred_check_branch
      %1645 = sbr.rel (0) target = $region37
    $region36: #{tpu_custom_call.1} parent=1 // pred_region
      %1646 = dma.done [#allocation4], 1024
    $region37: #{tpu_custom_call.1} parent=1 // pred_fallthru
      _
    %1647 = vsyncpa [#allocation3], 1
    %1648 = vsyncpa [#allocation6], 1
    %1649 = vsyncpa [#allocation4], 1

</llo_original>
